<compile_context>
chip_gen: v5e
topology: v5e:2x2
jax: 0.10.0
libtpu: 0.0.40
codegen_flags: <defaults>
</compile_context>

<pallas_src>
from functools import partial

import numpy as np
import jax
import jax.numpy as jnp
from jax.experimental import pallas as pl
from jax.experimental.pallas import tpu as pltpu


def _lane_fold_sum(v, period, width):
    """v: (1, width) whose lanes are (w, c) with channel period `period`.
    Returns (1, width) where every lane holds the sum over its channel's
    width//period lane group (requires width // period to be a power of 2)."""
    shift = period
    while shift < width:
        v = v + pltpu.roll(v, shift=shift, axis=1)
        shift *= 2
    return v


def generator_kernel(z_ref, wl_ref, bl_ref, w0_ref, b0_ref, g0_ref, bt0_ref,
                     w1_ref, b1_ref, o_ref, x0p_s, x1p_s,
                     *, B, H0, W0, C0, C1, C2p):
    Hp0 = H0 + 2
    H1, W1 = 2 * H0, 2 * W0
    Hp1 = H1 + 2
    W2 = 2 * W1
    D0 = W0 * C0          # lane width of conv#0 LHS rows          (= 128)
    N1 = W1 * C1          # lane width of conv#0 output / taps blk (= 128)
    N2 = W2 * C2p         # lane width of conv#1 output / taps blk (= 128)

    # ---- Linear + ReLU (weight columns pre-permuted to (h, w, c) order) -----
    h = jnp.dot(z_ref[...], wl_ref[...], preferred_element_type=jnp.float32)
    h = jnp.maximum(h + bl_ref[...], 0.0)                  # (B, H0*W0*C0)

    # ---- build conv#0 LHS: (B*Hp0, W0*C0); rows (b, padded h), lanes (w, c) -
    zrow0 = jnp.zeros((1, D0), jnp.float32)
    for b in range(B):
        base = b * Hp0
        x0p_s[base:base + 1, :] = zrow0                    # top halo row
        x0p_s[base + Hp0 - 1:base + Hp0, :] = zrow0        # bottom halo row
        for hh in range(H0):
            # vreg-aligned 128-lane slice of the Linear output -> one row store
            x0p_s[base + 1 + hh:base + 2 + hh, :] = \
                h[b:b + 1, hh * D0:(hh + 1) * D0]

    # ---- ConvTranspose2d #0: one lane-dense matmul over all 4 kernel rows ---
    # lanes of taps0: [ky=0 | ky=1 | ky=2 | ky=3], each block (ox, co) c-minor
    taps0 = jnp.dot(x0p_s[...], w0_ref[...], preferred_element_type=jnp.float32)

    # ---- H-axis parity-tap combination + one-pass BatchNorm statistics ------
    m = float(B * H1 * W1)
    s1 = jnp.zeros((1, N1), jnp.float32)
    s2 = jnp.zeros((1, N1), jnp.float32)
    b0t = b0_ref[...]
    planes0 = []
    for b in range(B):
        base = b * Hp0
        # output rows 0,2,4,.. : taps(ky=1, iy=a) + taps(ky=3, iy=a-1)
        ev = (taps0[base + 1:base + 1 + H0, N1:2 * N1]
              + taps0[base:base + H0, 3 * N1:4 * N1] + b0t)
        # output rows 1,3,5,.. : taps(ky=2, iy=a) + taps(ky=0, iy=a+1)
        od = (taps0[base + 1:base + 1 + H0, 2 * N1:3 * N1]
              + taps0[base + 2:base + 2 + H0, 0:N1] + b0t)
        planes0.append((ev, od))
        s1 = s1 + jnp.sum(ev, axis=0, keepdims=True) \
                + jnp.sum(od, axis=0, keepdims=True)
        s2 = s2 + jnp.sum(ev * ev, axis=0, keepdims=True) \
                + jnp.sum(od * od, axis=0, keepdims=True)

    # fold the W groups (lane stride C1) with XLU rolls -> per-channel stats
    s1 = _lane_fold_sum(s1, C1, N1)
    s2 = _lane_fold_sum(s2, C1, N1)
    mean = s1 * (1.0 / m)
    var = s2 * (1.0 / m) - mean * mean          # biased (torch train-mode BN)
    inv = jax.lax.rsqrt(var + 1e-5)
    scale = inv * g0_ref[...]
    shift = bt0_ref[...] - mean * scale

    # ---- BN + ReLU; interleave parity rows into conv#1's padded LHS ---------
    zrow1 = jnp.zeros((1, N1), jnp.float32)
    for b in range(B):
        ev, od = planes0[b]
        ebn = jnp.maximum(ev * scale + shift, 0.0)         # (H0, N1) lane-dense
        obn = jnp.maximum(od * scale + shift, 0.0)
        base = b * Hp1
        x1p_s[base:base + 1, :] = zrow1                    # halo rows only
        x1p_s[base + Hp1 - 1:base + Hp1, :] = zrow1
        for a in range(H0):
            x1p_s[base + 1 + 2 * a:base + 2 + 2 * a, :] = ebn[a:a + 1, :]
            x1p_s[base + 2 + 2 * a:base + 3 + 2 * a, :] = obn[a:a + 1, :]

    # ---- ConvTranspose2d #1 (one matmul) + tanh, lane-dense output ----------
    taps1 = jnp.dot(x1p_s[...], w1_ref[...], preferred_element_type=jnp.float32)
    b1t = b1_ref[...]
    for b in range(B):
        base = b * Hp1
        ev2 = (taps1[base + 1:base + 1 + H1, N2:2 * N2]
               + taps1[base:base + H1, 3 * N2:4 * N2] + b1t)        # rows 0,2,..
        od2 = (taps1[base + 1:base + 1 + H1, 2 * N2:3 * N2]
               + taps1[base + 2:base + 2 + H1, 0:N2] + b1t)         # rows 1,3,..
        o_ref[0, b * H1:(b + 1) * H1, :] = jnp.tanh(ev2)   # dense (H1,128) store
        o_ref[1, b * H1:(b + 1) * H1, :] = jnp.tanh(od2)


def _convt_tap_matrix(w, win, cout_pad):
    """Offline weight packing: w (4,4,Cin,Cout) -> (win*Cin, 4*wout*cout_pad).
    For each kernel row ky, the lane block [ky*wout*cout_pad : ...] holds the
    1-D transposed conv (k=4, s=2, p=1) along W as a block-Toeplitz matrix,
    with Cout zero-padded to cout_pad.  Pure layout/packing, no per-input math."""
    kh, kw, cin, cout = w.shape
    wout = 2 * win
    mat = np.zeros((win * cin, kh * wout * cout_pad), np.float32)
    wnp = np.asarray(w, np.float32)
    for ky in range(kh):
        for kx in range(kw):
            for iw in range(win):
                ox = 2 * iw + kx - 1
                if 0 <= ox < wout:
                    col = ky * wout * cout_pad + ox * cout_pad
                    mat[iw * cin:(iw + 1) * cin, col:col + cout] += wnp[ky, kx]
    return jnp.asarray(mat)


def generator_forward(z, params, *, n_filters, init_res, channels):
    """DCGAN Generator forward.  z: (B, latent).  Returns NCHW (B, C, 4r, 4r)."""
    B, L = z.shape
    C0, H0, W0 = n_filters, init_res, init_res
    C1, C2 = n_filters // 2, channels
    C2p = 8 if C2 <= 8 else C2                    # lane-pad final Cout
    H1, W1 = 2 * H0, 2 * W0
    H2, W2 = 2 * H1, 2 * W1

    # Offline-style weight packing (pure layout permutations, no math).
    w_lin = (params["w_lin"].reshape(L, C0, H0, W0)
             .transpose(0, 2, 3, 1).reshape(L, H0 * W0 * C0))
    b_lin = (params["b_lin"].reshape(C0, H0, W0)
             .transpose(1, 2, 0).reshape(1, H0 * W0 * C0))
    w0_all = _convt_tap_matrix(params["w0"], W0, C1)        # (W0*C0, 4*W1*C1)
    w1_all = _convt_tap_matrix(params["w1"], W1, C2p)       # (W1*C1, 4*W2*C2p)
    b0_t = jnp.tile(params["b0"], W1).reshape(1, W1 * C1)   # lanes (w, c)
    g0_t = jnp.tile(params["g0"], W1).reshape(1, W1 * C1)
    bt0_t = jnp.tile(params["beta0"], W1).reshape(1, W1 * C1)
    b1p = jnp.concatenate(
        [params["b1"], jnp.zeros((C2p - C2,), jnp.float32)])
    b1_t = jnp.tile(b1p, W2).reshape(1, W2 * C2p)

    kernel = partial(generator_kernel,
                     B=B, H0=H0, W0=W0, C0=C0, C1=C1, C2p=C2p)
    out = pl.pallas_call(
        kernel,
        out_shape=jax.ShapeDtypeStruct((2, B * H1, W2 * C2p), jnp.float32),
        scratch_shapes=[
            pltpu.VMEM((B * (H0 + 2), W0 * C0), jnp.float32),   # conv#0 LHS
            pltpu.VMEM((B * (H1 + 2), W1 * C1), jnp.float32),   # conv#1 LHS
        ],
    )(z, w_lin, b_lin, w0_all, b0_t, g0_t, bt0_t, w1_all, b1_t)

    # Tiny XLA glue (~32 KB): parity interleave, drop pad channels, NCHW.
    ev = out[0].reshape(B, H1, W2, C2p)
    od = out[1].reshape(B, H1, W2, C2p)
    img = jnp.stack([ev, od], axis=2).reshape(B, H2, W2, C2p)
    return img[..., :C2].transpose(0, 3, 1, 2)


# ----------------------------------------------------------------------------
# Pure-JAX reference (for self-check; no torch)
# ----------------------------------------------------------------------------
def reference_forward(z, params, *, n_filters, init_res):
    hp = jax.lax.Precision.HIGHEST
    h = jnp.maximum(jnp.dot(z, params["w_lin"], precision=hp) + params["b_lin"], 0.0)
    B = z.shape[0]
    x = h.reshape(B, n_filters, init_res, init_res).transpose(0, 2, 3, 1)

    def convt_ref(x, w, b):
        # conv_transpose(k=4,s=2,p=1) == dilated conv with flipped kernel
        w_conv = jnp.flip(w, axis=(0, 1))            # (4,4,Cin,Cout) HWIO
        y = jax.lax.conv_general_dilated(
            x, w_conv, window_strides=(1, 1), padding=((2, 2), (2, 2)),
            lhs_dilation=(2, 2), dimension_numbers=("NHWC", "HWIO", "NHWC"),
            precision=hp)
        return y + b.reshape(1, 1, 1, -1)

    x = convt_ref(x, params["w0"], params["b0"])
    mean = x.mean(axis=(0, 1, 2), keepdims=True)
    var = ((x - mean) ** 2).mean(axis=(0, 1, 2), keepdims=True)
    x = (x - mean) * jax.lax.rsqrt(var + 1e-5) \
        * params["g0"].reshape(1, 1, 1, -1) + params["beta0"].reshape(1, 1, 1, -1)
    x = jnp.maximum(x, 0.0)
    x = convt_ref(x, params["w1"], params["b1"])
    x = jnp.tanh(x)
    return x.transpose(0, 3, 1, 2)


if __name__ == "__main__":
    # Small config consistent with the module's constructor.
    B = 2
    latent_dim = 16
    n_layers = 2
    n_filters = 32
    channels = 3
    resolution = 16
    init_res = resolution // (2 ** n_layers)          # 4

    key = jax.random.PRNGKey(0)
    ks = jax.random.split(key, 10)

    z = jax.random.normal(ks[0], (B, latent_dim), jnp.float32)

    d_lin = n_filters * init_res * init_res           # 512
    c0_in, c0_out = n_filters, n_filters // 2         # 32 -> 16
    c1_in, c1_out = c0_out, channels                  # 16 -> 3

    params = {
        # Linear weight in torch column order (c, h, w).
        "w_lin": 0.05 * jax.random.normal(ks[1], (latent_dim, d_lin), jnp.float32),
        "b_lin": 0.01 * jax.random.normal(ks[2], (d_lin,), jnp.float32),
        # ConvTranspose weights stored as (kh, kw, Cin, Cout)
        # (== PyTorch weight[Cin, Cout, kh, kw] permuted).
        "w0": 0.05 * jax.random.normal(ks[3], (4, 4, c0_in, c0_out), jnp.float32),
        "b0": 0.01 * jax.random.normal(ks[4], (c0_out,), jnp.float32),
        "g0": 1.0 + 0.1 * jax.random.normal(ks[5], (c0_out,), jnp.float32),
        "beta0": 0.1 * jax.random.normal(ks[6], (c0_out,), jnp.float32),
        "w1": 0.05 * jax.random.normal(ks[7], (4, 4, c1_in, c1_out), jnp.float32),
        "b1": 0.01 * jax.random.normal(ks[8], (c1_out,), jnp.float32),
    }

    out = generator_forward(z, params, n_filters=n_filters, init_res=init_res,
                            channels=channels)
    out = jax.block_until_ready(out)
    assert out.shape == (B, channels, resolution, resolution), out.shape

    ref = jax.block_until_ready(
        reference_forward(z, params, n_filters=n_filters, init_res=init_res))
    if not jnp.allclose(out, ref, atol=1e-3, rtol=1e-3):
        raise AssertionError(
            f"mismatch vs JAX reference, max abs err = {jnp.max(jnp.abs(out - ref))}")

    print("KERNEL_OK")
</pallas_src>

<mosaic_0001>
module attributes {stable_mosaic.version = 11 : i64} {
  func.func @generator_kernel(%arg0: memref<2x16xf32, #tpu.memory_space<vmem>>, %arg1: memref<16x512xf32, #tpu.memory_space<vmem>>, %arg2: memref<1x512xf32, #tpu.memory_space<vmem>>, %arg3: memref<128x512xf32, #tpu.memory_space<vmem>>, %arg4: memref<1x128xf32, #tpu.memory_space<vmem>>, %arg5: memref<1x128xf32, #tpu.memory_space<vmem>>, %arg6: memref<1x128xf32, #tpu.memory_space<vmem>>, %arg7: memref<128x512xf32, #tpu.memory_space<vmem>>, %arg8: memref<1x128xf32, #tpu.memory_space<vmem>>, %arg9: memref<2x16x128xf32, #tpu.memory_space<vmem>>, %arg10: memref<12x128xf32, #tpu.memory_space<vmem>>, %arg11: memref<20x128xf32, #tpu.memory_space<vmem>>) attributes {dimension_semantics = [], scalar_prefetch = 0 : i64, scratch_operands = 2 : i64, tpu.core_type = #tpu.core_type<tc>} {
    %c0 = arith.constant 0 : index
    %c0_0 = arith.constant 0 : index
    %0 = vector.load %arg0[%c0, %c0_0] : memref<2x16xf32, #tpu.memory_space<vmem>>, vector<2x16xf32>
    %c0_1 = arith.constant 0 : index
    %c0_2 = arith.constant 0 : index
    %1 = vector.load %arg1[%c0_1, %c0_2] : memref<16x512xf32, #tpu.memory_space<vmem>>, vector<16x512xf32>
    %cst = arith.constant dense<0.000000e+00> : vector<2x512xf32>
    %2 = tpu.matmul %0, %1, %cst {dimension_numbers = #tpu.dot_dimension_numbers<[1], [0], [0], [1], [0, 0, 1, 1], [], []>} : vector<2x16xf32>, vector<16x512xf32>, vector<2x512xf32> -> vector<2x512xf32>
    %c0_3 = arith.constant 0 : index
    %c0_4 = arith.constant 0 : index
    %3 = vector.load %arg2[%c0_3, %c0_4] : memref<1x512xf32, #tpu.memory_space<vmem>>, vector<1x512xf32>
    %4 = vector.broadcast %3 : vector<1x512xf32> to vector<2x512xf32>
    %5 = arith.addf %2, %4 : vector<2x512xf32>
    %cst_5 = arith.constant 0.000000e+00 : f32
    %6 = vector.broadcast %cst_5 : f32 to vector<2x512xf32>
    %7 = arith.maximumf %5, %6 : vector<2x512xf32>
    %cst_6 = arith.constant 0.000000e+00 : f32
    %8 = vector.broadcast %cst_6 : f32 to vector<1x128xf32>
    %c0_7 = arith.constant 0 : index
    %c0_8 = arith.constant 0 : index
    %9 = vector.load %arg10[%c0_7, %c0_8] : memref<12x128xf32, #tpu.memory_space<vmem>>, vector<1x128xf32>
    tpu.vector_store %arg10[%c0_7, %c0_8], %8 {strides = array<i32>} : memref<12x128xf32, #tpu.memory_space<vmem>>, vector<1x128xf32>,
    %c5 = arith.constant 5 : index
    %c0_9 = arith.constant 0 : index
    %10 = vector.load %arg10[%c5, %c0_9] : memref<12x128xf32, #tpu.memory_space<vmem>>, vector<1x128xf32>
    tpu.vector_store %arg10[%c5, %c0_9], %8 {strides = array<i32>} : memref<12x128xf32, #tpu.memory_space<vmem>>, vector<1x128xf32>,
    %11 = vector.extract_strided_slice %7 {offsets = [0, 0], sizes = [1, 128], strides = [1, 1]} : vector<2x512xf32> to vector<1x128xf32>
    %c1 = arith.constant 1 : index
    %c0_10 = arith.constant 0 : index
    %12 = vector.load %arg10[%c1, %c0_10] : memref<12x128xf32, #tpu.memory_space<vmem>>, vector<1x128xf32>
    tpu.vector_store %arg10[%c1, %c0_10], %11 {strides = array<i32>} : memref<12x128xf32, #tpu.memory_space<vmem>>, vector<1x128xf32>,
    %13 = vector.extract_strided_slice %7 {offsets = [0, 128], sizes = [1, 128], strides = [1, 1]} : vector<2x512xf32> to vector<1x128xf32>
    %c2 = arith.constant 2 : index
    %c0_11 = arith.constant 0 : index
    %14 = vector.load %arg10[%c2, %c0_11] : memref<12x128xf32, #tpu.memory_space<vmem>>, vector<1x128xf32>
    tpu.vector_store %arg10[%c2, %c0_11], %13 {strides = array<i32>} : memref<12x128xf32, #tpu.memory_space<vmem>>, vector<1x128xf32>,
    %15 = vector.extract_strided_slice %7 {offsets = [0, 256], sizes = [1, 128], strides = [1, 1]} : vector<2x512xf32> to vector<1x128xf32>
    %c3 = arith.constant 3 : index
    %c0_12 = arith.constant 0 : index
    %16 = vector.load %arg10[%c3, %c0_12] : memref<12x128xf32, #tpu.memory_space<vmem>>, vector<1x128xf32>
    tpu.vector_store %arg10[%c3, %c0_12], %15 {strides = array<i32>} : memref<12x128xf32, #tpu.memory_space<vmem>>, vector<1x128xf32>,
    %17 = vector.extract_strided_slice %7 {offsets = [0, 384], sizes = [1, 128], strides = [1, 1]} : vector<2x512xf32> to vector<1x128xf32>
    %c4 = arith.constant 4 : index
    %c0_13 = arith.constant 0 : index
    %18 = vector.load %arg10[%c4, %c0_13] : memref<12x128xf32, #tpu.memory_space<vmem>>, vector<1x128xf32>
    tpu.vector_store %arg10[%c4, %c0_13], %17 {strides = array<i32>} : memref<12x128xf32, #tpu.memory_space<vmem>>, vector<1x128xf32>,
    %c6 = arith.constant 6 : index
    %c0_14 = arith.constant 0 : index
    %19 = vector.load %arg10[%c6, %c0_14] : memref<12x128xf32, #tpu.memory_space<vmem>>, vector<1x128xf32>
    tpu.vector_store %arg10[%c6, %c0_14], %8 {strides = array<i32>} : memref<12x128xf32, #tpu.memory_space<vmem>>, vector<1x128xf32>,
    %c11 = arith.constant 11 : index
    %c0_15 = arith.constant 0 : index
    %20 = vector.load %arg10[%c11, %c0_15] : memref<12x128xf32, #tpu.memory_space<vmem>>, vector<1x128xf32>
    tpu.vector_store %arg10[%c11, %c0_15], %8 {strides = array<i32>} : memref<12x128xf32, #tpu.memory_space<vmem>>, vector<1x128xf32>,
    %21 = vector.extract_strided_slice %7 {offsets = [1, 0], sizes = [1, 128], strides = [1, 1]} : vector<2x512xf32> to vector<1x128xf32>
    %c7 = arith.constant 7 : index
    %c0_16 = arith.constant 0 : index
    %22 = vector.load %arg10[%c7, %c0_16] : memref<12x128xf32, #tpu.memory_space<vmem>>, vector<1x128xf32>
    tpu.vector_store %arg10[%c7, %c0_16], %21 {strides = array<i32>} : memref<12x128xf32, #tpu.memory_space<vmem>>, vector<1x128xf32>,
    %23 = vector.extract_strided_slice %7 {offsets = [1, 128], sizes = [1, 128], strides = [1, 1]} : vector<2x512xf32> to vector<1x128xf32>
    %c8 = arith.constant 8 : index
    %c0_17 = arith.constant 0 : index
    %24 = vector.load %arg10[%c8, %c0_17] : memref<12x128xf32, #tpu.memory_space<vmem>>, vector<1x128xf32>
    tpu.vector_store %arg10[%c8, %c0_17], %23 {strides = array<i32>} : memref<12x128xf32, #tpu.memory_space<vmem>>, vector<1x128xf32>,
    %25 = vector.extract_strided_slice %7 {offsets = [1, 256], sizes = [1, 128], strides = [1, 1]} : vector<2x512xf32> to vector<1x128xf32>
    %c9 = arith.constant 9 : index
    %c0_18 = arith.constant 0 : index
    %26 = vector.load %arg10[%c9, %c0_18] : memref<12x128xf32, #tpu.memory_space<vmem>>, vector<1x128xf32>
    tpu.vector_store %arg10[%c9, %c0_18], %25 {strides = array<i32>} : memref<12x128xf32, #tpu.memory_space<vmem>>, vector<1x128xf32>,
    %27 = vector.extract_strided_slice %7 {offsets = [1, 384], sizes = [1, 128], strides = [1, 1]} : vector<2x512xf32> to vector<1x128xf32>
    %c10 = arith.constant 10 : index
    %c0_19 = arith.constant 0 : index
    %28 = vector.load %arg10[%c10, %c0_19] : memref<12x128xf32, #tpu.memory_space<vmem>>, vector<1x128xf32>
    tpu.vector_store %arg10[%c10, %c0_19], %27 {strides = array<i32>} : memref<12x128xf32, #tpu.memory_space<vmem>>, vector<1x128xf32>,
    %c0_20 = arith.constant 0 : index
    %c0_21 = arith.constant 0 : index
    %29 = vector.load %arg10[%c0_20, %c0_21] : memref<12x128xf32, #tpu.memory_space<vmem>>, vector<12x128xf32>
    %c0_22 = arith.constant 0 : index
    %c0_23 = arith.constant 0 : index
    %30 = vector.load %arg3[%c0_22, %c0_23] : memref<128x512xf32, #tpu.memory_space<vmem>>, vector<128x512xf32>
    %cst_24 = arith.constant dense<0.000000e+00> : vector<12x512xf32>
    %31 = tpu.matmul %29, %30, %cst_24 {dimension_numbers = #tpu.dot_dimension_numbers<[1], [0], [0], [1], [0, 0, 1, 1], [], []>} : vector<12x128xf32>, vector<128x512xf32>, vector<12x512xf32> -> vector<12x512xf32>
    %cst_25 = arith.constant 0.000000e+00 : f32
    %32 = vector.broadcast %cst_25 : f32 to vector<1x128xf32>
    %cst_26 = arith.constant 0.000000e+00 : f32
    %33 = vector.broadcast %cst_26 : f32 to vector<1x128xf32>
    %c0_27 = arith.constant 0 : index
    %c0_28 = arith.constant 0 : index
    %34 = vector.load %arg4[%c0_27, %c0_28] : memref<1x128xf32, #tpu.memory_space<vmem>>, vector<1x128xf32>
    %35 = vector.extract_strided_slice %31 {offsets = [1, 128], sizes = [4, 128], strides = [1, 1]} : vector<12x512xf32> to vector<4x128xf32>
    %36 = vector.extract_strided_slice %31 {offsets = [0, 384], sizes = [4, 128], strides = [1, 1]} : vector<12x512xf32> to vector<4x128xf32>
    %37 = arith.addf %35, %36 : vector<4x128xf32>
    %38 = vector.broadcast %34 : vector<1x128xf32> to vector<4x128xf32>
    %39 = arith.addf %37, %38 : vector<4x128xf32>
    %40 = vector.extract_strided_slice %31 {offsets = [1, 256], sizes = [4, 128], strides = [1, 1]} : vector<12x512xf32> to vector<4x128xf32>
    %41 = vector.extract_strided_slice %31 {offsets = [2, 0], sizes = [4, 128], strides = [1, 1]} : vector<12x512xf32> to vector<4x128xf32>
    %42 = arith.addf %40, %41 : vector<4x128xf32>
    %43 = vector.broadcast %34 : vector<1x128xf32> to vector<4x128xf32>
    %44 = arith.addf %42, %43 : vector<4x128xf32>
    %cst_29 = arith.constant dense<0.000000e+00> : vector<128xf32>
    %45 = vector.multi_reduction <add>, %39, %cst_29 [0] : vector<4x128xf32> to vector<128xf32>
    %46 = vector.shape_cast %45 : vector<128xf32> to vector<1x128xf32>
    %47 = arith.addf %32, %46 : vector<1x128xf32>
    %cst_30 = arith.constant dense<0.000000e+00> : vector<128xf32>
    %48 = vector.multi_reduction <add>, %44, %cst_30 [0] : vector<4x128xf32> to vector<128xf32>
    %49 = vector.shape_cast %48 : vector<128xf32> to vector<1x128xf32>
    %50 = arith.addf %47, %49 : vector<1x128xf32>
    %51 = arith.mulf %39, %39 : vector<4x128xf32>
    %cst_31 = arith.constant dense<0.000000e+00> : vector<128xf32>
    %52 = vector.multi_reduction <add>, %51, %cst_31 [0] : vector<4x128xf32> to vector<128xf32>
    %53 = vector.shape_cast %52 : vector<128xf32> to vector<1x128xf32>
    %54 = arith.addf %33, %53 : vector<1x128xf32>
    %55 = arith.mulf %44, %44 : vector<4x128xf32>
    %cst_32 = arith.constant dense<0.000000e+00> : vector<128xf32>
    %56 = vector.multi_reduction <add>, %55, %cst_32 [0] : vector<4x128xf32> to vector<128xf32>
    %57 = vector.shape_cast %56 : vector<128xf32> to vector<1x128xf32>
    %58 = arith.addf %54, %57 : vector<1x128xf32>
    %59 = vector.extract_strided_slice %31 {offsets = [7, 128], sizes = [4, 128], strides = [1, 1]} : vector<12x512xf32> to vector<4x128xf32>
    %60 = vector.extract_strided_slice %31 {offsets = [6, 384], sizes = [4, 128], strides = [1, 1]} : vector<12x512xf32> to vector<4x128xf32>
    %61 = arith.addf %59, %60 : vector<4x128xf32>
    %62 = vector.broadcast %34 : vector<1x128xf32> to vector<4x128xf32>
    %63 = arith.addf %61, %62 : vector<4x128xf32>
    %64 = vector.extract_strided_slice %31 {offsets = [7, 256], sizes = [4, 128], strides = [1, 1]} : vector<12x512xf32> to vector<4x128xf32>
    %65 = vector.extract_strided_slice %31 {offsets = [8, 0], sizes = [4, 128], strides = [1, 1]} : vector<12x512xf32> to vector<4x128xf32>
    %66 = arith.addf %64, %65 : vector<4x128xf32>
    %67 = vector.broadcast %34 : vector<1x128xf32> to vector<4x128xf32>
    %68 = arith.addf %66, %67 : vector<4x128xf32>
    %cst_33 = arith.constant dense<0.000000e+00> : vector<128xf32>
    %69 = vector.multi_reduction <add>, %63, %cst_33 [0] : vector<4x128xf32> to vector<128xf32>
    %70 = vector.shape_cast %69 : vector<128xf32> to vector<1x128xf32>
    %71 = arith.addf %50, %70 : vector<1x128xf32>
    %cst_34 = arith.constant dense<0.000000e+00> : vector<128xf32>
    %72 = vector.multi_reduction <add>, %68, %cst_34 [0] : vector<4x128xf32> to vector<128xf32>
    %73 = vector.shape_cast %72 : vector<128xf32> to vector<1x128xf32>
    %74 = arith.addf %71, %73 : vector<1x128xf32>
    %75 = arith.mulf %63, %63 : vector<4x128xf32>
    %cst_35 = arith.constant dense<0.000000e+00> : vector<128xf32>
    %76 = vector.multi_reduction <add>, %75, %cst_35 [0] : vector<4x128xf32> to vector<128xf32>
    %77 = vector.shape_cast %76 : vector<128xf32> to vector<1x128xf32>
    %78 = arith.addf %58, %77 : vector<1x128xf32>
    %79 = arith.mulf %68, %68 : vector<4x128xf32>
    %cst_36 = arith.constant dense<0.000000e+00> : vector<128xf32>
    %80 = vector.multi_reduction <add>, %79, %cst_36 [0] : vector<4x128xf32> to vector<128xf32>
    %81 = vector.shape_cast %80 : vector<128xf32> to vector<1x128xf32>
    %82 = arith.addf %78, %81 : vector<1x128xf32>
    %c16_i32 = arith.constant 16 : i32
    %83 = tpu.dynamic_rotate %74 by %c16_i32 dim 1 : vector<1x128xf32>, i32 -> vector<1x128xf32>
    %84 = arith.addf %74, %83 : vector<1x128xf32>
    %c32_i32 = arith.constant 32 : i32
    %85 = tpu.dynamic_rotate %84 by %c32_i32 dim 1 : vector<1x128xf32>, i32 -> vector<1x128xf32>
    %86 = arith.addf %84, %85 : vector<1x128xf32>
    %c64_i32 = arith.constant 64 : i32
    %87 = tpu.dynamic_rotate %86 by %c64_i32 dim 1 : vector<1x128xf32>, i32 -> vector<1x128xf32>
    %88 = arith.addf %86, %87 : vector<1x128xf32>
    %c16_i32_37 = arith.constant 16 : i32
    %89 = tpu.dynamic_rotate %82 by %c16_i32_37 dim 1 : vector<1x128xf32>, i32 -> vector<1x128xf32>
    %90 = arith.addf %82, %89 : vector<1x128xf32>
    %c32_i32_38 = arith.constant 32 : i32
    %91 = tpu.dynamic_rotate %90 by %c32_i32_38 dim 1 : vector<1x128xf32>, i32 -> vector<1x128xf32>
    %92 = arith.addf %90, %91 : vector<1x128xf32>
    %c64_i32_39 = arith.constant 64 : i32
    %93 = tpu.dynamic_rotate %92 by %c64_i32_39 dim 1 : vector<1x128xf32>, i32 -> vector<1x128xf32>
    %94 = arith.addf %92, %93 : vector<1x128xf32>
    %cst_40 = arith.constant 7.812500e-03 : f32
    %95 = vector.broadcast %cst_40 : f32 to vector<1x128xf32>
    %96 = arith.mulf %88, %95 : vector<1x128xf32>
    %cst_41 = arith.constant 7.812500e-03 : f32
    %97 = vector.broadcast %cst_41 : f32 to vector<1x128xf32>
    %98 = arith.mulf %94, %97 : vector<1x128xf32>
    %99 = arith.mulf %96, %96 : vector<1x128xf32>
    %100 = arith.subf %98, %99 : vector<1x128xf32>
    %cst_42 = arith.constant 9.99999974E-6 : f32
    %101 = vector.broadcast %cst_42 : f32 to vector<1x128xf32>
    %102 = arith.addf %100, %101 : vector<1x128xf32>
    %103 = math.rsqrt %102 : vector<1x128xf32>
    %c0_43 = arith.constant 0 : index
    %c0_44 = arith.constant 0 : index
    %104 = vector.load %arg5[%c0_43, %c0_44] : memref<1x128xf32, #tpu.memory_space<vmem>>, vector<1x128xf32>
    %105 = arith.mulf %103, %104 : vector<1x128xf32>
    %c0_45 = arith.constant 0 : index
    %c0_46 = arith.constant 0 : index
    %106 = vector.load %arg6[%c0_45, %c0_46] : memref<1x128xf32, #tpu.memory_space<vmem>>, vector<1x128xf32>
    %107 = arith.mulf %96, %105 : vector<1x128xf32>
    %108 = arith.subf %106, %107 : vector<1x128xf32>
    %cst_47 = arith.constant 0.000000e+00 : f32
    %109 = vector.broadcast %cst_47 : f32 to vector<1x128xf32>
    %110 = vector.broadcast %105 : vector<1x128xf32> to vector<4x128xf32>
    %111 = arith.mulf %39, %110 : vector<4x128xf32>
    %112 = vector.broadcast %108 : vector<1x128xf32> to vector<4x128xf32>
    %113 = arith.addf %111, %112 : vector<4x128xf32>
    %cst_48 = arith.constant 0.000000e+00 : f32
    %114 = vector.broadcast %cst_48 : f32 to vector<4x128xf32>
    %115 = arith.maximumf %113, %114 : vector<4x128xf32>
    %116 = vector.broadcast %105 : vector<1x128xf32> to vector<4x128xf32>
    %117 = arith.mulf %44, %116 : vector<4x128xf32>
    %118 = vector.broadcast %108 : vector<1x128xf32> to vector<4x128xf32>
    %119 = arith.addf %117, %118 : vector<4x128xf32>
    %cst_49 = arith.constant 0.000000e+00 : f32
    %120 = vector.broadcast %cst_49 : f32 to vector<4x128xf32>
    %121 = arith.maximumf %119, %120 : vector<4x128xf32>
    %c0_50 = arith.constant 0 : index
    %c0_51 = arith.constant 0 : index
    %122 = vector.load %arg11[%c0_50, %c0_51] : memref<20x128xf32, #tpu.memory_space<vmem>>, vector<1x128xf32>
    tpu.vector_store %arg11[%c0_50, %c0_51], %109 {strides = array<i32>} : memref<20x128xf32, #tpu.memory_space<vmem>>, vector<1x128xf32>,
    %c9_52 = arith.constant 9 : index
    %c0_53 = arith.constant 0 : index
    %123 = vector.load %arg11[%c9_52, %c0_53] : memref<20x128xf32, #tpu.memory_space<vmem>>, vector<1x128xf32>
    tpu.vector_store %arg11[%c9_52, %c0_53], %109 {strides = array<i32>} : memref<20x128xf32, #tpu.memory_space<vmem>>, vector<1x128xf32>,
    %124 = vector.extract_strided_slice %115 {offsets = [0, 0], sizes = [1, 128], strides = [1, 1]} : vector<4x128xf32> to vector<1x128xf32>
    %c1_54 = arith.constant 1 : index
    %c0_55 = arith.constant 0 : index
    %125 = vector.load %arg11[%c1_54, %c0_55] : memref<20x128xf32, #tpu.memory_space<vmem>>, vector<1x128xf32>
    tpu.vector_store %arg11[%c1_54, %c0_55], %124 {strides = array<i32>} : memref<20x128xf32, #tpu.memory_space<vmem>>, vector<1x128xf32>,
    %126 = vector.extract_strided_slice %121 {offsets = [0, 0], sizes = [1, 128], strides = [1, 1]} : vector<4x128xf32> to vector<1x128xf32>
    %c2_56 = arith.constant 2 : index
    %c0_57 = arith.constant 0 : index
    %127 = vector.load %arg11[%c2_56, %c0_57] : memref<20x128xf32, #tpu.memory_space<vmem>>, vector<1x128xf32>
    tpu.vector_store %arg11[%c2_56, %c0_57], %126 {strides = array<i32>} : memref<20x128xf32, #tpu.memory_space<vmem>>, vector<1x128xf32>,
    %128 = vector.extract_strided_slice %115 {offsets = [1, 0], sizes = [1, 128], strides = [1, 1]} : vector<4x128xf32> to vector<1x128xf32>
    %c3_58 = arith.constant 3 : index
    %c0_59 = arith.constant 0 : index
    %129 = vector.load %arg11[%c3_58, %c0_59] : memref<20x128xf32, #tpu.memory_space<vmem>>, vector<1x128xf32>
    tpu.vector_store %arg11[%c3_58, %c0_59], %128 {strides = array<i32>} : memref<20x128xf32, #tpu.memory_space<vmem>>, vector<1x128xf32>,
    %130 = vector.extract_strided_slice %121 {offsets = [1, 0], sizes = [1, 128], strides = [1, 1]} : vector<4x128xf32> to vector<1x128xf32>
    %c4_60 = arith.constant 4 : index
    %c0_61 = arith.constant 0 : index
    %131 = vector.load %arg11[%c4_60, %c0_61] : memref<20x128xf32, #tpu.memory_space<vmem>>, vector<1x128xf32>
    tpu.vector_store %arg11[%c4_60, %c0_61], %130 {strides = array<i32>} : memref<20x128xf32, #tpu.memory_space<vmem>>, vector<1x128xf32>,
    %132 = vector.extract_strided_slice %115 {offsets = [2, 0], sizes = [1, 128], strides = [1, 1]} : vector<4x128xf32> to vector<1x128xf32>
    %c5_62 = arith.constant 5 : index
    %c0_63 = arith.constant 0 : index
    %133 = vector.load %arg11[%c5_62, %c0_63] : memref<20x128xf32, #tpu.memory_space<vmem>>, vector<1x128xf32>
    tpu.vector_store %arg11[%c5_62, %c0_63], %132 {strides = array<i32>} : memref<20x128xf32, #tpu.memory_space<vmem>>, vector<1x128xf32>,
    %134 = vector.extract_strided_slice %121 {offsets = [2, 0], sizes = [1, 128], strides = [1, 1]} : vector<4x128xf32> to vector<1x128xf32>
    %c6_64 = arith.constant 6 : index
    %c0_65 = arith.constant 0 : index
    %135 = vector.load %arg11[%c6_64, %c0_65] : memref<20x128xf32, #tpu.memory_space<vmem>>, vector<1x128xf32>
    tpu.vector_store %arg11[%c6_64, %c0_65], %134 {strides = array<i32>} : memref<20x128xf32, #tpu.memory_space<vmem>>, vector<1x128xf32>,
    %136 = vector.extract_strided_slice %115 {offsets = [3, 0], sizes = [1, 128], strides = [1, 1]} : vector<4x128xf32> to vector<1x128xf32>
    %c7_66 = arith.constant 7 : index
    %c0_67 = arith.constant 0 : index
    %137 = vector.load %arg11[%c7_66, %c0_67] : memref<20x128xf32, #tpu.memory_space<vmem>>, vector<1x128xf32>
    tpu.vector_store %arg11[%c7_66, %c0_67], %136 {strides = array<i32>} : memref<20x128xf32, #tpu.memory_space<vmem>>, vector<1x128xf32>,
    %138 = vector.extract_strided_slice %121 {offsets = [3, 0], sizes = [1, 128], strides = [1, 1]} : vector<4x128xf32> to vector<1x128xf32>
    %c8_68 = arith.constant 8 : index
    %c0_69 = arith.constant 0 : index
    %139 = vector.load %arg11[%c8_68, %c0_69] : memref<20x128xf32, #tpu.memory_space<vmem>>, vector<1x128xf32>
    tpu.vector_store %arg11[%c8_68, %c0_69], %138 {strides = array<i32>} : memref<20x128xf32, #tpu.memory_space<vmem>>, vector<1x128xf32>,
    %140 = vector.broadcast %105 : vector<1x128xf32> to vector<4x128xf32>
    %141 = arith.mulf %63, %140 : vector<4x128xf32>
    %142 = vector.broadcast %108 : vector<1x128xf32> to vector<4x128xf32>
    %143 = arith.addf %141, %142 : vector<4x128xf32>
    %cst_70 = arith.constant 0.000000e+00 : f32
    %144 = vector.broadcast %cst_70 : f32 to vector<4x128xf32>
    %145 = arith.maximumf %143, %144 : vector<4x128xf32>
    %146 = vector.broadcast %105 : vector<1x128xf32> to vector<4x128xf32>
    %147 = arith.mulf %68, %146 : vector<4x128xf32>
    %148 = vector.broadcast %108 : vector<1x128xf32> to vector<4x128xf32>
    %149 = arith.addf %147, %148 : vector<4x128xf32>
    %cst_71 = arith.constant 0.000000e+00 : f32
    %150 = vector.broadcast %cst_71 : f32 to vector<4x128xf32>
    %151 = arith.maximumf %149, %150 : vector<4x128xf32>
    %c10_72 = arith.constant 10 : index
    %c0_73 = arith.constant 0 : index
    %152 = vector.load %arg11[%c10_72, %c0_73] : memref<20x128xf32, #tpu.memory_space<vmem>>, vector<1x128xf32>
    tpu.vector_store %arg11[%c10_72, %c0_73], %109 {strides = array<i32>} : memref<20x128xf32, #tpu.memory_space<vmem>>, vector<1x128xf32>,
    %c19 = arith.constant 19 : index
    %c0_74 = arith.constant 0 : index
    %153 = vector.load %arg11[%c19, %c0_74] : memref<20x128xf32, #tpu.memory_space<vmem>>, vector<1x128xf32>
    tpu.vector_store %arg11[%c19, %c0_74], %109 {strides = array<i32>} : memref<20x128xf32, #tpu.memory_space<vmem>>, vector<1x128xf32>,
    %154 = vector.extract_strided_slice %145 {offsets = [0, 0], sizes = [1, 128], strides = [1, 1]} : vector<4x128xf32> to vector<1x128xf32>
    %c11_75 = arith.constant 11 : index
    %c0_76 = arith.constant 0 : index
    %155 = vector.load %arg11[%c11_75, %c0_76] : memref<20x128xf32, #tpu.memory_space<vmem>>, vector<1x128xf32>
    tpu.vector_store %arg11[%c11_75, %c0_76], %154 {strides = array<i32>} : memref<20x128xf32, #tpu.memory_space<vmem>>, vector<1x128xf32>,
    %156 = vector.extract_strided_slice %151 {offsets = [0, 0], sizes = [1, 128], strides = [1, 1]} : vector<4x128xf32> to vector<1x128xf32>
    %c12 = arith.constant 12 : index
    %c0_77 = arith.constant 0 : index
    %157 = vector.load %arg11[%c12, %c0_77] : memref<20x128xf32, #tpu.memory_space<vmem>>, vector<1x128xf32>
    tpu.vector_store %arg11[%c12, %c0_77], %156 {strides = array<i32>} : memref<20x128xf32, #tpu.memory_space<vmem>>, vector<1x128xf32>,
    %158 = vector.extract_strided_slice %145 {offsets = [1, 0], sizes = [1, 128], strides = [1, 1]} : vector<4x128xf32> to vector<1x128xf32>
    %c13 = arith.constant 13 : index
    %c0_78 = arith.constant 0 : index
    %159 = vector.load %arg11[%c13, %c0_78] : memref<20x128xf32, #tpu.memory_space<vmem>>, vector<1x128xf32>
    tpu.vector_store %arg11[%c13, %c0_78], %158 {strides = array<i32>} : memref<20x128xf32, #tpu.memory_space<vmem>>, vector<1x128xf32>,
    %160 = vector.extract_strided_slice %151 {offsets = [1, 0], sizes = [1, 128], strides = [1, 1]} : vector<4x128xf32> to vector<1x128xf32>
    %c14 = arith.constant 14 : index
    %c0_79 = arith.constant 0 : index
    %161 = vector.load %arg11[%c14, %c0_79] : memref<20x128xf32, #tpu.memory_space<vmem>>, vector<1x128xf32>
    tpu.vector_store %arg11[%c14, %c0_79], %160 {strides = array<i32>} : memref<20x128xf32, #tpu.memory_space<vmem>>, vector<1x128xf32>,
    %162 = vector.extract_strided_slice %145 {offsets = [2, 0], sizes = [1, 128], strides = [1, 1]} : vector<4x128xf32> to vector<1x128xf32>
    %c15 = arith.constant 15 : index
    %c0_80 = arith.constant 0 : index
    %163 = vector.load %arg11[%c15, %c0_80] : memref<20x128xf32, #tpu.memory_space<vmem>>, vector<1x128xf32>
    tpu.vector_store %arg11[%c15, %c0_80], %162 {strides = array<i32>} : memref<20x128xf32, #tpu.memory_space<vmem>>, vector<1x128xf32>,
    %164 = vector.extract_strided_slice %151 {offsets = [2, 0], sizes = [1, 128], strides = [1, 1]} : vector<4x128xf32> to vector<1x128xf32>
    %c16 = arith.constant 16 : index
    %c0_81 = arith.constant 0 : index
    %165 = vector.load %arg11[%c16, %c0_81] : memref<20x128xf32, #tpu.memory_space<vmem>>, vector<1x128xf32>
    tpu.vector_store %arg11[%c16, %c0_81], %164 {strides = array<i32>} : memref<20x128xf32, #tpu.memory_space<vmem>>, vector<1x128xf32>,
    %166 = vector.extract_strided_slice %145 {offsets = [3, 0], sizes = [1, 128], strides = [1, 1]} : vector<4x128xf32> to vector<1x128xf32>
    %c17 = arith.constant 17 : index
    %c0_82 = arith.constant 0 : index
    %167 = vector.load %arg11[%c17, %c0_82] : memref<20x128xf32, #tpu.memory_space<vmem>>, vector<1x128xf32>
    tpu.vector_store %arg11[%c17, %c0_82], %166 {strides = array<i32>} : memref<20x128xf32, #tpu.memory_space<vmem>>, vector<1x128xf32>,
    %168 = vector.extract_strided_slice %151 {offsets = [3, 0], sizes = [1, 128], strides = [1, 1]} : vector<4x128xf32> to vector<1x128xf32>
    %c18 = arith.constant 18 : index
    %c0_83 = arith.constant 0 : index
    %169 = vector.load %arg11[%c18, %c0_83] : memref<20x128xf32, #tpu.memory_space<vmem>>, vector<1x128xf32>
    tpu.vector_store %arg11[%c18, %c0_83], %168 {strides = array<i32>} : memref<20x128xf32, #tpu.memory_space<vmem>>, vector<1x128xf32>,
    %c0_84 = arith.constant 0 : index
    %c0_85 = arith.constant 0 : index
    %170 = vector.load %arg11[%c0_84, %c0_85] : memref<20x128xf32, #tpu.memory_space<vmem>>, vector<20x128xf32>
    %c0_86 = arith.constant 0 : index
    %c0_87 = arith.constant 0 : index
    %171 = vector.load %arg7[%c0_86, %c0_87] : memref<128x512xf32, #tpu.memory_space<vmem>>, vector<128x512xf32>
    %cst_88 = arith.constant dense<0.000000e+00> : vector<20x512xf32>
    %172 = tpu.matmul %170, %171, %cst_88 {dimension_numbers = #tpu.dot_dimension_numbers<[1], [0], [0], [1], [0, 0, 1, 1], [], []>} : vector<20x128xf32>, vector<128x512xf32>, vector<20x512xf32> -> vector<20x512xf32>
    %c0_89 = arith.constant 0 : index
    %c0_90 = arith.constant 0 : index
    %173 = vector.load %arg8[%c0_89, %c0_90] : memref<1x128xf32, #tpu.memory_space<vmem>>, vector<1x128xf32>
    %174 = vector.extract_strided_slice %172 {offsets = [1, 128], sizes = [8, 128], strides = [1, 1]} : vector<20x512xf32> to vector<8x128xf32>
    %175 = vector.extract_strided_slice %172 {offsets = [0, 384], sizes = [8, 128], strides = [1, 1]} : vector<20x512xf32> to vector<8x128xf32>
    %176 = arith.addf %174, %175 : vector<8x128xf32>
    %177 = vector.broadcast %173 : vector<1x128xf32> to vector<8x128xf32>
    %178 = arith.addf %176, %177 : vector<8x128xf32>
    %179 = vector.extract_strided_slice %172 {offsets = [1, 256], sizes = [8, 128], strides = [1, 1]} : vector<20x512xf32> to vector<8x128xf32>
    %180 = vector.extract_strided_slice %172 {offsets = [2, 0], sizes = [8, 128], strides = [1, 1]} : vector<20x512xf32> to vector<8x128xf32>
    %181 = arith.addf %179, %180 : vector<8x128xf32>
    %182 = vector.broadcast %173 : vector<1x128xf32> to vector<8x128xf32>
    %183 = arith.addf %181, %182 : vector<8x128xf32>
    %184 = math.tanh %178 : vector<8x128xf32>
    %c0_91 = arith.constant 0 : index
    %c0_92 = arith.constant 0 : index
    %c0_93 = arith.constant 0 : index
    %185 = vector.load %arg9[%c0_91, %c0_92, %c0_93] : memref<2x16x128xf32, #tpu.memory_space<vmem>>, vector<1x8x128xf32>
    %186 = vector.shape_cast %185 : vector<1x8x128xf32> to vector<8x128xf32>
    %187 = vector.shape_cast %184 : vector<8x128xf32> to vector<1x8x128xf32>
    tpu.vector_store %arg9[%c0_91, %c0_92, %c0_93], %187 {strides = array<i32>} : memref<2x16x128xf32, #tpu.memory_space<vmem>>, vector<1x8x128xf32>,
    %188 = math.tanh %183 : vector<8x128xf32>
    %c1_94 = arith.constant 1 : index
    %c0_95 = arith.constant 0 : index
    %c0_96 = arith.constant 0 : index
    %189 = vector.load %arg9[%c1_94, %c0_95, %c0_96] : memref<2x16x128xf32, #tpu.memory_space<vmem>>, vector<1x8x128xf32>
    %190 = vector.shape_cast %189 : vector<1x8x128xf32> to vector<8x128xf32>
    %191 = vector.shape_cast %188 : vector<8x128xf32> to vector<1x8x128xf32>
    tpu.vector_store %arg9[%c1_94, %c0_95, %c0_96], %191 {strides = array<i32>} : memref<2x16x128xf32, #tpu.memory_space<vmem>>, vector<1x8x128xf32>,
    %192 = vector.extract_strided_slice %172 {offsets = [11, 128], sizes = [8, 128], strides = [1, 1]} : vector<20x512xf32> to vector<8x128xf32>
    %193 = vector.extract_strided_slice %172 {offsets = [10, 384], sizes = [8, 128], strides = [1, 1]} : vector<20x512xf32> to vector<8x128xf32>
    %194 = arith.addf %192, %193 : vector<8x128xf32>
    %195 = vector.broadcast %173 : vector<1x128xf32> to vector<8x128xf32>
    %196 = arith.addf %194, %195 : vector<8x128xf32>
    %197 = vector.extract_strided_slice %172 {offsets = [11, 256], sizes = [8, 128], strides = [1, 1]} : vector<20x512xf32> to vector<8x128xf32>
    %198 = vector.extract_strided_slice %172 {offsets = [12, 0], sizes = [8, 128], strides = [1, 1]} : vector<20x512xf32> to vector<8x128xf32>
    %199 = arith.addf %197, %198 : vector<8x128xf32>
    %200 = vector.broadcast %173 : vector<1x128xf32> to vector<8x128xf32>
    %201 = arith.addf %199, %200 : vector<8x128xf32>
    %202 = math.tanh %196 : vector<8x128xf32>
    %c0_97 = arith.constant 0 : index
    %c8_98 = arith.constant 8 : index
    %c0_99 = arith.constant 0 : index
    %203 = vector.load %arg9[%c0_97, %c8_98, %c0_99] : memref<2x16x128xf32, #tpu.memory_space<vmem>>, vector<1x8x128xf32>
    %204 = vector.shape_cast %203 : vector<1x8x128xf32> to vector<8x128xf32>
    %205 = vector.shape_cast %202 : vector<8x128xf32> to vector<1x8x128xf32>
    tpu.vector_store %arg9[%c0_97, %c8_98, %c0_99], %205 {strides = array<i32>} : memref<2x16x128xf32, #tpu.memory_space<vmem>>, vector<1x8x128xf32>,
    %206 = math.tanh %201 : vector<8x128xf32>
    %c1_100 = arith.constant 1 : index
    %c8_101 = arith.constant 8 : index
    %c0_102 = arith.constant 0 : index
    %207 = vector.load %arg9[%c1_100, %c8_101, %c0_102] : memref<2x16x128xf32, #tpu.memory_space<vmem>>, vector<1x8x128xf32>
    %208 = vector.shape_cast %207 : vector<1x8x128xf32> to vector<8x128xf32>
    %209 = vector.shape_cast %206 : vector<8x128xf32> to vector<1x8x128xf32>
    tpu.vector_store %arg9[%c1_100, %c8_101, %c0_102], %209 {strides = array<i32>} : memref<2x16x128xf32, #tpu.memory_space<vmem>>, vector<1x8x128xf32>,
    return
  }
}

</mosaic_0001>

<llo_original>
// kernel: tpu_custom_call.1
$region0: #{tpu_custom_call.1}
  #allocation0 [shape = 'u32[]', space=smem, size = 0x4, offset = 0x4, fixed_abs, tag = 'smem constant byte address 0x4 - core index']
  #allocation1 [shape = 'u32[72,128]{1,0:T(1,128)}', space=vmem, size = 0x9000, scoped, tag = 'internal scratch']
  #allocation2 [shape = 'f32[12,128]{1,0:T(8,128)}', space=vmem, size = 0x2000, scoped, tag = 'scratch operand']
  #allocation3 [shape = 'f32[20,128]{1,0:T(8,128)}', space=vmem, size = 0x3000, scoped, tag = 'scratch operand']
  %s0 = inlined_call_operand.hbm [shape: f32[2,16], index: 0, kind: input, shape index: {}]
  %s1 = inlined_call_operand.hbm [shape: f32[16,512], index: 1, kind: input, shape index: {}]
  %s2 = inlined_call_operand.hbm [shape: f32[1,512], index: 2, kind: input, shape index: {}]
  %s3 = inlined_call_operand.hbm [shape: f32[128,512], index: 3, kind: input, shape index: {}]
  %s4 = inlined_call_operand.vmem [shape: f32[1,128], index: 4, kind: input, shape index: {}]
  %s5 = inlined_call_operand.vmem [shape: f32[1,128], index: 5, kind: input, shape index: {}]
  %s6 = inlined_call_operand.vmem [shape: f32[1,128], index: 6, kind: input, shape index: {}]
  %s7 = inlined_call_operand.hbm [shape: f32[128,512], index: 7, kind: input, shape index: {}]
  %s8 = inlined_call_operand.vmem [shape: f32[1,128], index: 8, kind: input, shape index: {}]
  %s9 = inlined_call_operand.hbm [shape: f32[2,16,128], index: 9, kind: output, shape index: {}]
  %s10 = sld [smem:[#allocation0]]
  $region66: #{tpu_custom_call.1} parent=0
    _
  %s12 = ssub.s32 1, %s10
  %s13 = scalar_select 0, %s12, %s10
  $region1: #{tpu_custom_call.1} parent=0
    #allocation4 [shape = 'u8[1024]{0}', space=vmem, size = 0x400, scoped, tag = 'input window, operand 0, single buffered']
    #allocation5 [shape = 's32[1]{0}', space=sflag, size = 0x4, scoped, tag = 'scoped memory for tpu_custom_call.1']
    #allocation6 [shape = 's32[1]{0}', space=sflag, size = 0x4, scoped, tag = 'scoped memory for tpu_custom_call.1']
    #allocation7 [shape = 'u8[32768]{0}', space=vmem, size = 0x8000, scoped, tag = 'input window, operand 1, single buffered']
    #allocation8 [shape = 's32[1]{0}', space=sflag, size = 0x4, scoped, tag = 'scoped memory for tpu_custom_call.1']
    #allocation9 [shape = 'u8[2048]{0}', space=vmem, size = 0x800, scoped, tag = 'input window, operand 2, single buffered']
    #allocation10 [shape = 'u8[262144]{0}', space=vmem, size = 0x40000, scoped, tag = 'input window, operand 3, single buffered']
    #allocation11 [shape = 's32[1]{0}', space=sflag, size = 0x4, scoped, tag = 'scoped memory for tpu_custom_call.1']
    #allocation12 [shape = 'u8[262144]{0}', space=vmem, size = 0x40000, scoped, tag = 'input window, operand 7, single buffered']
    #allocation13 [shape = 'u8[16384]{0}', space=vmem, size = 0x4000, scoped, tag = 'output window, operand 0, single buffered']
    %14 = vsyncpa [#allocation5], 0
    %15 = vsyncpa [#allocation8], 0
    %16 = vsyncpa [#allocation11], 0
    %17 = vsyncpa [#allocation6], 0
    // Predicated region
    $region2: #{tpu_custom_call.1} parent=1 // pred_check
      _
    $region3: #{tpu_custom_call.1} parent=1 // pred_check_branch
      %19 = sbr.rel (0) target = $region5
    $region4: #{tpu_custom_call.1} parent=1 // pred_region
      %21 = vsyncadd [#allocation5], 0
      %s23 = sshll.u32 %s0, 4
      %s24 = int_to_ptr.hbm [resolvable:$true] %s23
      %s25 = sshll.u32 [#allocation4], 4
      %s26 = int_to_ptr.vmem [resolvable:$true] %s25
      %28 = dma.hbm_to_vmem [thread:$0]  %s24, 32, %s26, [#allocation5]
    $region5: #{tpu_custom_call.1} parent=1 // pred_fallthru
      _
    // Predicated region
    $region6: #{tpu_custom_call.1} parent=1 // pred_check
      _
    $region7: #{tpu_custom_call.1} parent=1 // pred_check_branch
      %30 = sbr.rel (0) target = $region9
    $region8: #{tpu_custom_call.1} parent=1 // pred_region
      %32 = vsyncadd [#allocation8], 0
      %s33 = sshll.u32 %s1, 4
      %s34 = int_to_ptr.hbm [resolvable:$true] %s33
      %s35 = sshll.u32 [#allocation7], 4
      %s36 = int_to_ptr.vmem [resolvable:$true] %s35
      %41 = dma.hbm_to_vmem [thread:$0]  %s34, 1024, %s36, [#allocation8], 512, 512, 32
    $region9: #{tpu_custom_call.1} parent=1 // pred_fallthru
      _
    // Predicated region
    $region10: #{tpu_custom_call.1} parent=1 // pred_check
      _
    $region11: #{tpu_custom_call.1} parent=1 // pred_check_branch
      %43 = sbr.rel (0) target = $region13
    $region12: #{tpu_custom_call.1} parent=1 // pred_region
      %45 = vsyncadd [#allocation8], 0
      %s47 = sshll.u32 %s2, 4
      %s48 = int_to_ptr.hbm [resolvable:$true] %s47
      %s49 = sshll.u32 [#allocation9], 4
      %s50 = int_to_ptr.vmem [resolvable:$true] %s49
      %52 = dma.hbm_to_vmem [thread:$0]  %s48, 64, %s50, [#allocation8]
    $region13: #{tpu_custom_call.1} parent=1 // pred_fallthru
      _
    // Predicated region
    $region14: #{tpu_custom_call.1} parent=1 // pred_check
      _
    $region15: #{tpu_custom_call.1} parent=1 // pred_check_branch
      %54 = sbr.rel (0) target = $region17
    $region16: #{tpu_custom_call.1} parent=1 // pred_region
      %56 = vsyncadd [#allocation11], 0
      %s57 = sshll.u32 %s3, 4
      %s58 = int_to_ptr.hbm [resolvable:$true] %s57
      %s59 = sshll.u32 [#allocation10], 4
      %s60 = int_to_ptr.vmem [resolvable:$true] %s59
      %65 = dma.hbm_to_vmem [thread:$0]  %s58, 8192, %s60, [#allocation11], 512, 512, 32
    $region17: #{tpu_custom_call.1} parent=1 // pred_fallthru
      _
    // Predicated region
    $region18: #{tpu_custom_call.1} parent=1 // pred_check
      _
    $region19: #{tpu_custom_call.1} parent=1 // pred_check_branch
      %67 = sbr.rel (0) target = $region21
    $region20: #{tpu_custom_call.1} parent=1 // pred_region
      _
    $region21: #{tpu_custom_call.1} parent=1 // pred_fallthru
      _
    // Predicated region
    $region22: #{tpu_custom_call.1} parent=1 // pred_check
      _
    $region23: #{tpu_custom_call.1} parent=1 // pred_check_branch
      %69 = sbr.rel (0) target = $region25
    $region24: #{tpu_custom_call.1} parent=1 // pred_region
      _
    $region25: #{tpu_custom_call.1} parent=1 // pred_fallthru
      _
    // Predicated region
    $region26: #{tpu_custom_call.1} parent=1 // pred_check
      _
    $region27: #{tpu_custom_call.1} parent=1 // pred_check_branch
      %71 = sbr.rel (0) target = $region29
    $region28: #{tpu_custom_call.1} parent=1 // pred_region
      _
    $region29: #{tpu_custom_call.1} parent=1 // pred_fallthru
      _
    // Predicated region
    $region30: #{tpu_custom_call.1} parent=1 // pred_check
      _
    $region31: #{tpu_custom_call.1} parent=1 // pred_check_branch
      %73 = sbr.rel (0) target = $region33
    $region32: #{tpu_custom_call.1} parent=1 // pred_region
      %75 = vsyncadd [#allocation11], 0
      %s76 = sshll.u32 %s7, 4
      %s77 = int_to_ptr.hbm [resolvable:$true] %s76
      %s78 = sshll.u32 [#allocation12], 4
      %s79 = int_to_ptr.vmem [resolvable:$true] %s78
      %84 = dma.hbm_to_vmem [thread:$0]  %s77, 8192, %s79, [#allocation11], 512, 512, 32
    $region33: #{tpu_custom_call.1} parent=1 // pred_fallthru
      _
    // Predicated region
    $region34: #{tpu_custom_call.1} parent=1 // pred_check
      _
    $region35: #{tpu_custom_call.1} parent=1 // pred_check_branch
      %86 = sbr.rel (0) target = $region37
    $region36: #{tpu_custom_call.1} parent=1 // pred_region
      _
    $region37: #{tpu_custom_call.1} parent=1 // pred_fallthru
      _
    // Predicated region
    $region38: #{tpu_custom_call.1} parent=1 // pred_check
      _
    $region39: #{tpu_custom_call.1} parent=1 // pred_check_branch
      %88 = sbr.rel (0) target = $region41
    $region40: #{tpu_custom_call.1} parent=1 // pred_region
      %90 = dma.done [#allocation5], 32
    $region41: #{tpu_custom_call.1} parent=1 // pred_fallthru
      _
    // Predicated region
    $region42: #{tpu_custom_call.1} parent=1 // pred_check
      _
    $region43: #{tpu_custom_call.1} parent=1 // pred_check_branch
      %92 = sbr.rel (0) target = $region45
    $region44: #{tpu_custom_call.1} parent=1 // pred_region
      %94 = dma.done [#allocation8], 1024
    $region45: #{tpu_custom_call.1} parent=1 // pred_fallthru
      _
    // Predicated region
    $region46: #{tpu_custom_call.1} parent=1 // pred_check
      _
    $region47: #{tpu_custom_call.1} parent=1 // pred_check_branch
      %96 = sbr.rel (0) target = $region49
    $region48: #{tpu_custom_call.1} parent=1 // pred_region
      %98 = dma.done [#allocation8], 64
    $region49: #{tpu_custom_call.1} parent=1 // pred_fallthru
      _
    // Predicated region
    $region50: #{tpu_custom_call.1} parent=1 // pred_check
      _
    $region51: #{tpu_custom_call.1} parent=1 // pred_check_branch
      %100 = sbr.rel (0) target = $region53
    $region52: #{tpu_custom_call.1} parent=1 // pred_region
      %102 = dma.done [#allocation11], 8192
    $region53: #{tpu_custom_call.1} parent=1 // pred_fallthru
      _
    // Predicated region
    $region54: #{tpu_custom_call.1} parent=1 // pred_check
      _
    $region55: #{tpu_custom_call.1} parent=1 // pred_check_branch
      %104 = sbr.rel (0) target = $region57
    $region56: #{tpu_custom_call.1} parent=1 // pred_region
      %106 = dma.done [#allocation11], 8192
    $region57: #{tpu_custom_call.1} parent=1 // pred_fallthru
      _
    %v107 = vld [vmem:[#allocation4] sm:$0x3]
    %v108 = vld [vmem:[#allocation7] sm:$0xff]
    %v109 = vld [vmem:[#allocation7 + $0x8] sm:$0xff]
    %v110 = vld [vmem:[#allocation7 + $0x10] sm:$0xff]
    %v111 = vld [vmem:[#allocation7 + $0x18] sm:$0xff]
    %v112 = vld [vmem:[#allocation7 + $0x20] sm:$0xff]
    %v113 = vld [vmem:[#allocation7 + $0x28] sm:$0xff]
    %v114 = vld [vmem:[#allocation7 + $0x30] sm:$0xff]
    %v115 = vld [vmem:[#allocation7 + $0x38] sm:$0xff]
    %v116 = vld [vmem:[#allocation9] sm:$0xf]
    %v118 = vperm.slane %v116, 0
    %v119 = vperm.slane %v116, 1
    %v120 = vperm.slane %v116, 2
    %v121 = vperm.slane %v116, 3
    %vm126 = vcmask 130048
    %v128 = vsel %vm126, %v107, 0
    %130 = vmatpush.msra.mxu0 0.0
    %131 = vmatpush.msra.mxu0 0.0
    %132 = vmatpush.msra.mxu0 0.0
    %133 = vmatpush.msra.mxu0 0.0
    %134 = vmatpush.msra.mxu0 0.0
    %135 = vmatpush.msra.mxu0 0.0
    %136 = vmatpush.msra.mxu0 0.0
    %137 = vmatpush.msra.mxu0 0.0
    %138 = vmatpush.msra.mxu0 0.0
    %139 = vmatpush.msra.mxu0 0.0
    %140 = vmatpush.msra.mxu0 0.0
    %141 = vmatpush.msra.mxu0 0.0
    %142 = vmatpush.msra.mxu0 0.0
    %143 = vmatpush.msra.mxu0 0.0
    %144 = vmatpush.msra.mxu0 %v112
    %145 = vmatpush.msra.mxu0 %v108
    %146 = vmatmul.f32.gmra.mxu0 %v128
    %v147 = vpop.f32.mrf.mxu0
    %v148 = vadd.f32 %v118, %v147
    %149 = vdwg.mxu0
    %150 = vmatpush.msra.mxu0 0.0
    %151 = vmatpush.msra.mxu0 0.0
    %152 = vmatpush.msra.mxu0 0.0
    %153 = vmatpush.msra.mxu0 0.0
    %154 = vmatpush.msra.mxu0 0.0
    %155 = vmatpush.msra.mxu0 0.0
    %156 = vmatpush.msra.mxu0 0.0
    %157 = vmatpush.msra.mxu0 0.0
    %158 = vmatpush.msra.mxu0 0.0
    %159 = vmatpush.msra.mxu0 0.0
    %160 = vmatpush.msra.mxu0 0.0
    %161 = vmatpush.msra.mxu0 0.0
    %162 = vmatpush.msra.mxu0 0.0
    %163 = vmatpush.msra.mxu0 0.0
    %164 = vmatpush.msra.mxu0 %v113
    %165 = vmatpush.msra.mxu0 %v109
    %166 = vmatmul.f32.gmra.mxu0 %v128
    %v167 = vpop.f32.mrf.mxu0
    %v168 = vadd.f32 %v119, %v167
    %169 = vdwg.mxu0
    %170 = vmatpush.msra.mxu0 0.0
    %171 = vmatpush.msra.mxu0 0.0
    %172 = vmatpush.msra.mxu0 0.0
    %173 = vmatpush.msra.mxu0 0.0
    %174 = vmatpush.msra.mxu0 0.0
    %175 = vmatpush.msra.mxu0 0.0
    %176 = vmatpush.msra.mxu0 0.0
    %177 = vmatpush.msra.mxu0 0.0
    %178 = vmatpush.msra.mxu0 0.0
    %179 = vmatpush.msra.mxu0 0.0
    %180 = vmatpush.msra.mxu0 0.0
    %181 = vmatpush.msra.mxu0 0.0
    %182 = vmatpush.msra.mxu0 0.0
    %183 = vmatpush.msra.mxu0 0.0
    %184 = vmatpush.msra.mxu0 %v114
    %185 = vmatpush.msra.mxu0 %v110
    %186 = vmatmul.f32.gmra.mxu0 %v128
    %v187 = vpop.f32.mrf.mxu0
    %v188 = vadd.f32 %v120, %v187
    %189 = vdwg.mxu0
    %190 = vmatpush.msra.mxu0 0.0
    %191 = vmatpush.msra.mxu0 0.0
    %192 = vmatpush.msra.mxu0 0.0
    %193 = vmatpush.msra.mxu0 0.0
    %194 = vmatpush.msra.mxu0 0.0
    %195 = vmatpush.msra.mxu0 0.0
    %196 = vmatpush.msra.mxu0 0.0
    %197 = vmatpush.msra.mxu0 0.0
    %198 = vmatpush.msra.mxu0 0.0
    %199 = vmatpush.msra.mxu0 0.0
    %200 = vmatpush.msra.mxu0 0.0
    %201 = vmatpush.msra.mxu0 0.0
    %202 = vmatpush.msra.mxu0 0.0
    %203 = vmatpush.msra.mxu0 0.0
    %204 = vmatpush.msra.mxu0 %v115
    %205 = vmatpush.msra.mxu0 %v111
    %206 = vmatmul.f32.gmra.mxu0 %v128
    %v207 = vpop.f32.mrf.mxu0
    %v208 = vadd.f32 %v121, %v207
    %209 = vdwg.mxu0
    %v210 = vmax.f32 %v148, 0.0
    %v211 = vmax.f32 %v168, 0.0
    %v212 = vmax.f32 %v188, 0.0
    %v213 = vmax.f32 %v208, 0.0
    %214 = vst [vmem:[#allocation2] sm:$0x1] 0.0
    %215 = vst [vmem:[#allocation2 + $0x5] sm:$0x1] 0.0
    %216 = vst [vmem:[#allocation2 + $0x1] sm:$0x1] %v210
    %217 = vst [vmem:[#allocation2 + $0x2] sm:$0x1] %v211
    %218 = vst [vmem:[#allocation2 + $0x3] sm:$0x1] %v212
    %219 = vst [vmem:[#allocation2 + $0x4] sm:$0x1] %v213
    %220 = vst [vmem:[#allocation2 + $0x6] sm:$0x1] 0.0
    %221 = vst [vmem:[#allocation2 + $0xb] sm:$0x1] 0.0
    %222 = vst [vmem:[#allocation2 + $0x6] sm:$0x2] %v210
    %223 = vst [vmem:[#allocation2 + $0x7] sm:$0x2] %v211
    %224 = vst [vmem:[#allocation2 + $0x8] sm:$0x2] %v212
    %225 = vst [vmem:[#allocation2 + $0x9] sm:$0x2] %v213
    %v226 = vld [vmem:[#allocation2] sm:$0xff]
    %v227 = vld [vmem:[#allocation2 + $0x8] sm:$0xf]
    %v228 = vld [vmem:[#allocation10] sm:$0xff]
    %v229 = vld [vmem:[#allocation10 + $0x8] sm:$0xff]
    %v230 = vld [vmem:[#allocation10 + $0x10] sm:$0xff]
    %v231 = vld [vmem:[#allocation10 + $0x18] sm:$0xff]
    %v232 = vld [vmem:[#allocation10 + $0x20] sm:$0xff]
    %v233 = vld [vmem:[#allocation10 + $0x28] sm:$0xff]
    %v234 = vld [vmem:[#allocation10 + $0x30] sm:$0xff]
    %v235 = vld [vmem:[#allocation10 + $0x38] sm:$0xff]
    %v236 = vld [vmem:[#allocation10 + $0x40] sm:$0xff]
    %v237 = vld [vmem:[#allocation10 + $0x48] sm:$0xff]
    %v238 = vld [vmem:[#allocation10 + $0x50] sm:$0xff]
    %v239 = vld [vmem:[#allocation10 + $0x58] sm:$0xff]
    %v240 = vld [vmem:[#allocation10 + $0x60] sm:$0xff]
    %v241 = vld [vmem:[#allocation10 + $0x68] sm:$0xff]
    %v242 = vld [vmem:[#allocation10 + $0x70] sm:$0xff]
    %v243 = vld [vmem:[#allocation10 + $0x78] sm:$0xff]
    %v244 = vld [vmem:[#allocation10 + $0x80] sm:$0xff]
    %v245 = vld [vmem:[#allocation10 + $0x88] sm:$0xff]
    %v246 = vld [vmem:[#allocation10 + $0x90] sm:$0xff]
    %v247 = vld [vmem:[#allocation10 + $0x98] sm:$0xff]
    %v248 = vld [vmem:[#allocation10 + $0xa0] sm:$0xff]
    %v249 = vld [vmem:[#allocation10 + $0xa8] sm:$0xff]
    %v250 = vld [vmem:[#allocation10 + $0xb0] sm:$0xff]
    %v251 = vld [vmem:[#allocation10 + $0xb8] sm:$0xff]
    %v252 = vld [vmem:[#allocation10 + $0xc0] sm:$0xff]
    %v253 = vld [vmem:[#allocation10 + $0xc8] sm:$0xff]
    %v254 = vld [vmem:[#allocation10 + $0xd0] sm:$0xff]
    %v255 = vld [vmem:[#allocation10 + $0xd8] sm:$0xff]
    %v256 = vld [vmem:[#allocation10 + $0xe0] sm:$0xff]
    %v257 = vld [vmem:[#allocation10 + $0xe8] sm:$0xff]
    %v258 = vld [vmem:[#allocation10 + $0xf0] sm:$0xff]
    %v259 = vld [vmem:[#allocation10 + $0xf8] sm:$0xff]
    %v260 = vld [vmem:[#allocation10 + $0x100] sm:$0xff]
    %v261 = vld [vmem:[#allocation10 + $0x108] sm:$0xff]
    %v262 = vld [vmem:[#allocation10 + $0x110] sm:$0xff]
    %v263 = vld [vmem:[#allocation10 + $0x118] sm:$0xff]
    %v264 = vld [vmem:[#allocation10 + $0x120] sm:$0xff]
    %v265 = vld [vmem:[#allocation10 + $0x128] sm:$0xff]
    %v266 = vld [vmem:[#allocation10 + $0x130] sm:$0xff]
    %v267 = vld [vmem:[#allocation10 + $0x138] sm:$0xff]
    %v268 = vld [vmem:[#allocation10 + $0x140] sm:$0xff]
    %v269 = vld [vmem:[#allocation10 + $0x148] sm:$0xff]
    %v270 = vld [vmem:[#allocation10 + $0x150] sm:$0xff]
    %v271 = vld [vmem:[#allocation10 + $0x158] sm:$0xff]
    %v272 = vld [vmem:[#allocation10 + $0x160] sm:$0xff]
    %v273 = vld [vmem:[#allocation10 + $0x168] sm:$0xff]
    %v274 = vld [vmem:[#allocation10 + $0x170] sm:$0xff]
    %v275 = vld [vmem:[#allocation10 + $0x178] sm:$0xff]
    %v276 = vld [vmem:[#allocation10 + $0x180] sm:$0xff]
    %v277 = vld [vmem:[#allocation10 + $0x188] sm:$0xff]
    %v278 = vld [vmem:[#allocation10 + $0x190] sm:$0xff]
    %v279 = vld [vmem:[#allocation10 + $0x198] sm:$0xff]
    %v280 = vld [vmem:[#allocation10 + $0x1a0] sm:$0xff]
    %v281 = vld [vmem:[#allocation10 + $0x1a8] sm:$0xff]
    %v282 = vld [vmem:[#allocation10 + $0x1b0] sm:$0xff]
    %v283 = vld [vmem:[#allocation10 + $0x1b8] sm:$0xff]
    %v284 = vld [vmem:[#allocation10 + $0x1c0] sm:$0xff]
    %v285 = vld [vmem:[#allocation10 + $0x1c8] sm:$0xff]
    %v286 = vld [vmem:[#allocation10 + $0x1d0] sm:$0xff]
    %v287 = vld [vmem:[#allocation10 + $0x1d8] sm:$0xff]
    %v288 = vld [vmem:[#allocation10 + $0x1e0] sm:$0xff]
    %v289 = vld [vmem:[#allocation10 + $0x1e8] sm:$0xff]
    %v290 = vld [vmem:[#allocation10 + $0x1f0] sm:$0xff]
    %v291 = vld [vmem:[#allocation10 + $0x1f8] sm:$0xff]
    %292 = vmatpush.msra.mxu0 %v288
    %293 = vmatpush.msra.mxu0 %v284
    %294 = vmatpush.msra.mxu0 %v280
    %295 = vmatpush.msra.mxu0 %v276
    %296 = vmatpush.msra.mxu0 %v272
    %297 = vmatpush.msra.mxu0 %v268
    %298 = vmatpush.msra.mxu0 %v264
    %299 = vmatpush.msra.mxu0 %v260
    %300 = vmatpush.msra.mxu0 %v256
    %301 = vmatpush.msra.mxu0 %v252
    %302 = vmatpush.msra.mxu0 %v248
    %303 = vmatpush.msra.mxu0 %v244
    %304 = vmatpush.msra.mxu0 %v240
    %305 = vmatpush.msra.mxu0 %v236
    %306 = vmatpush.msra.mxu0 %v232
    %307 = vmatpush.msra.mxu0 %v228
    %308 = vmatmul.f32.gmra.mxu0 %v226
    %v309 = vpop.f32.mrf.mxu0
    %v310 = vadd.f32 0.0, %v309
    %311 = vmatmul.f32.gmra.mxu0 %v227
    %v312 = vpop.f32.mrf.mxu0
    %v313 = vadd.f32 0.0, %v312
    %314 = vdwg.mxu0
    %315 = vmatpush.msra.mxu0 %v289
    %316 = vmatpush.msra.mxu0 %v285
    %317 = vmatpush.msra.mxu0 %v281
    %318 = vmatpush.msra.mxu0 %v277
    %319 = vmatpush.msra.mxu0 %v273
    %320 = vmatpush.msra.mxu0 %v269
    %321 = vmatpush.msra.mxu0 %v265
    %322 = vmatpush.msra.mxu0 %v261
    %323 = vmatpush.msra.mxu0 %v257
    %324 = vmatpush.msra.mxu0 %v253
    %325 = vmatpush.msra.mxu0 %v249
    %326 = vmatpush.msra.mxu0 %v245
    %327 = vmatpush.msra.mxu0 %v241
    %328 = vmatpush.msra.mxu0 %v237
    %329 = vmatpush.msra.mxu0 %v233
    %330 = vmatpush.msra.mxu0 %v229
    %331 = vmatmul.f32.gmra.mxu0 %v226
    %v332 = vpop.f32.mrf.mxu0
    %v333 = vadd.f32 0.0, %v332
    %334 = vmatmul.f32.gmra.mxu0 %v227
    %v335 = vpop.f32.mrf.mxu0
    %v336 = vadd.f32 0.0, %v335
    %337 = vdwg.mxu0
    %338 = vmatpush.msra.mxu0 %v290
    %339 = vmatpush.msra.mxu0 %v286
    %340 = vmatpush.msra.mxu0 %v282
    %341 = vmatpush.msra.mxu0 %v278
    %342 = vmatpush.msra.mxu0 %v274
    %343 = vmatpush.msra.mxu0 %v270
    %344 = vmatpush.msra.mxu0 %v266
    %345 = vmatpush.msra.mxu0 %v262
    %346 = vmatpush.msra.mxu0 %v258
    %347 = vmatpush.msra.mxu0 %v254
    %348 = vmatpush.msra.mxu0 %v250
    %349 = vmatpush.msra.mxu0 %v246
    %350 = vmatpush.msra.mxu0 %v242
    %351 = vmatpush.msra.mxu0 %v238
    %352 = vmatpush.msra.mxu0 %v234
    %353 = vmatpush.msra.mxu0 %v230
    %354 = vmatmul.f32.gmra.mxu0 %v226
    %v355 = vpop.f32.mrf.mxu0
    %v356 = vadd.f32 0.0, %v355
    %357 = vmatmul.f32.gmra.mxu0 %v227
    %v358 = vpop.f32.mrf.mxu0
    %v359 = vadd.f32 0.0, %v358
    %360 = vdwg.mxu0
    %361 = vmatpush.msra.mxu0 %v291
    %362 = vmatpush.msra.mxu0 %v287
    %363 = vmatpush.msra.mxu0 %v283
    %364 = vmatpush.msra.mxu0 %v279
    %365 = vmatpush.msra.mxu0 %v275
    %366 = vmatpush.msra.mxu0 %v271
    %367 = vmatpush.msra.mxu0 %v267
    %368 = vmatpush.msra.mxu0 %v263
    %369 = vmatpush.msra.mxu0 %v259
    %370 = vmatpush.msra.mxu0 %v255
    %371 = vmatpush.msra.mxu0 %v251
    %372 = vmatpush.msra.mxu0 %v247
    %373 = vmatpush.msra.mxu0 %v243
    %374 = vmatpush.msra.mxu0 %v239
    %375 = vmatpush.msra.mxu0 %v235
    %376 = vmatpush.msra.mxu0 %v231
    %377 = vmatmul.f32.gmra.mxu0 %v226
    %v378 = vpop.f32.mrf.mxu0
    %v379 = vadd.f32 0.0, %v378
    %380 = vmatmul.f32.gmra.mxu0 %v227
    %v381 = vpop.f32.mrf.mxu0
    %v382 = vadd.f32 0.0, %v381
    %383 = vdwg.mxu0
    %v384 = vld [vmem:[%s4] sm:$0x1]
    %v386 = vrot.slane %v379, 7
    %v388 = vadd.f32 %v333, %v386
    %v390 = vperm.slane %v384, 0
    %v392 = vadd.f32 %v388, %v390
    %v394 = vrot.slane %v310, 1
    %v396 = vadd.f32 %v356, %v394
    %v397 = vadd.f32 %v396, %v390
    %v399 = vrot.slane %v392, 1
    %vm401 = vcmask 1043456
    %v402 = vsel %vm401, %v399, 0.0
    %v403 = vrot.slane %v402, 4
    %v404 = vadd.f32 %v402, %v403
    %v405 = vrot.slane %v404, 2
    %v406 = vadd.f32 %v404, %v405
    %v407 = vrot.slane %v406, 1
    %v408 = vadd.f32 %v406, %v407
    %v409 = vadd.f32 %v408, 0.0
    %v411 = vrot.slane %v397, 1
    %v413 = vsel %vm401, %v411, 0.0
    %v414 = vrot.slane %v413, 4
    %v415 = vadd.f32 %v413, %v414
    %v416 = vrot.slane %v415, 2
    %v417 = vadd.f32 %v415, %v416
    %v418 = vrot.slane %v417, 1
    %v419 = vadd.f32 %v417, %v418
    %v420 = vadd.f32 %v409, %v419
    %v421 = vmul.f32 %v392, %v392
    %v423 = vrot.slane %v421, 1
    %v425 = vsel %vm401, %v423, 0.0
    %v426 = vrot.slane %v425, 4
    %v427 = vadd.f32 %v425, %v426
    %v428 = vrot.slane %v427, 2
    %v429 = vadd.f32 %v427, %v428
    %v430 = vrot.slane %v429, 1
    %v431 = vadd.f32 %v429, %v430
    %v432 = vadd.f32 %v431, 0.0
    %v433 = vmul.f32 %v397, %v397
    %v435 = vrot.slane %v433, 1
    %v437 = vsel %vm401, %v435, 0.0
    %v438 = vrot.slane %v437, 4
    %v439 = vadd.f32 %v437, %v438
    %v440 = vrot.slane %v439, 2
    %v441 = vadd.f32 %v439, %v440
    %v442 = vrot.slane %v441, 1
    %v443 = vadd.f32 %v441, %v442
    %v444 = vadd.f32 %v432, %v443
    %vm446 = vcmask 1040384
    %v447 = vrot.slane %v382, 7
    %v448 = vsel %vm446, %v386, %v447
    %v450 = vadd.f32 %v336, %v448
    %v451 = vadd.f32 %v450, %v390
    %v453 = vrot.slane %v313, 1
    %v455 = vadd.f32 %v356, %v453
    %v456 = vadd.f32 %v359, %v453
    %v457 = vadd.f32 %v455, %v390
    %v458 = vadd.f32 %v456, %v390
    %v460 = vrot.slane %v392, 7
    %v461 = vrot.slane %v451, 7
    %v462 = vsel %vm446, %v460, %v461
    %v464 = vsel %vm401, %v462, 0.0
    %v465 = vrot.slane %v464, 4
    %v466 = vadd.f32 %v464, %v465
    %v467 = vrot.slane %v466, 2
    %v468 = vadd.f32 %v466, %v467
    %v469 = vrot.slane %v468, 1
    %v470 = vadd.f32 %v468, %v469
    %v471 = vadd.f32 %v420, %v470
    %v474 = vrot.slane %v457, 7
    %v475 = vrot.slane %v458, 7
    %v476 = vsel %vm446, %v474, %v475
    %v478 = vsel %vm401, %v476, 0.0
    %v479 = vrot.slane %v478, 4
    %v480 = vadd.f32 %v478, %v479
    %v481 = vrot.slane %v480, 2
    %v482 = vadd.f32 %v480, %v481
    %v483 = vrot.slane %v482, 1
    %v484 = vadd.f32 %v482, %v483
    %v485 = vadd.f32 %v471, %v484
    %v486 = vmul.f32 %v451, %v451
    %v488 = vrot.slane %v421, 7
    %v489 = vrot.slane %v486, 7
    %v490 = vsel %vm446, %v488, %v489
    %v492 = vsel %vm401, %v490, 0.0
    %v493 = vrot.slane %v492, 4
    %v494 = vadd.f32 %v492, %v493
    %v495 = vrot.slane %v494, 2
    %v496 = vadd.f32 %v494, %v495
    %v497 = vrot.slane %v496, 1
    %v498 = vadd.f32 %v496, %v497
    %v499 = vadd.f32 %v444, %v498
    %v500 = vmul.f32 %v457, %v457
    %v501 = vmul.f32 %v458, %v458
    %v504 = vrot.slane %v500, 7
    %v505 = vrot.slane %v501, 7
    %v506 = vsel %vm446, %v504, %v505
    %v508 = vsel %vm401, %v506, 0.0
    %v509 = vrot.slane %v508, 4
    %v510 = vadd.f32 %v508, %v509
    %v511 = vrot.slane %v510, 2
    %v512 = vadd.f32 %v510, %v511
    %v513 = vrot.slane %v512, 1
    %v514 = vadd.f32 %v512, %v513
    %v515 = vadd.f32 %v499, %v514
    %516 = vrot.lane.b32.xlu0 %v485, 16
    %v517 = vpop.permute.xlu0 %516
    %v518 = vadd.f32 %v485, %v517
    %519 = vrot.lane.b32.xlu0 %v518, 32
    %v520 = vpop.permute.xlu0 %519
    %v521 = vadd.f32 %v518, %v520
    %522 = vrot.lane.b32.xlu0 %v521, 64
    %v523 = vpop.permute.xlu0 %522
    %v524 = vadd.f32 %v521, %v523
    %525 = vrot.lane.b32.xlu0 %v515, 16
    %v526 = vpop.permute.xlu0 %525
    %v527 = vadd.f32 %v515, %v526
    %528 = vrot.lane.b32.xlu0 %v527, 32
    %v529 = vpop.permute.xlu0 %528
    %v530 = vadd.f32 %v527, %v529
    %531 = vrot.lane.b32.xlu0 %v530, 64
    %v532 = vpop.permute.xlu0 %531
    %v533 = vadd.f32 %v530, %v532
    %v534 = vmul.f32 %v524, 0.0078125
    %v535 = vmul.f32 %v533, 0.0078125
    %v536 = vmul.f32 %v534, %v534
    %v537 = vsub.f32 %v535, %v536
    %v538 = vadd.f32 %v537, 1e-05
    %v539 = vrsqrt.pop %v538
    %v540 = vmul.f32 %v539, %v538
    %v541 = vmul.f32 %v540, %v539
    %v542 = vmul.f32 0.5, %v541
    %v543 = vsub.f32 1.5, %v542
    %v544 = vmul.f32 %v539, %v543
    %vm545 = vweird.f32 %v538
    %vm546 = vweird.f32 %v539
    %vm547 = vmor %vm545, %vm546
    %v548 = vsel %vm547, %v539, %v544
    %v549 = vld [vmem:[%s5] sm:$0x1]
    %v550 = vmul.f32 %v548, %v549
    %v551 = vld [vmem:[%s6] sm:$0x1]
    %v552 = vmul.f32 %v534, %v550
    %v553 = vsub.f32 %v551, %v552
    %v554 = vperm.slane %v550, 0
    %v555 = vmul.f32 %v392, %v554
    %v557 = vperm.slane %v553, 0
    %v559 = vadd.f32 %v555, %v557
    %v560 = vmax.f32 %v559, 0.0
    %v561 = vmul.f32 %v397, %v554
    %v562 = vadd.f32 %v561, %v557
    %v563 = vmax.f32 %v562, 0.0
    %564 = vst [vmem:[#allocation3] sm:$0x1] 0.0
    %565 = vst [vmem:[#allocation3 + $0x9] sm:$0x1] 0.0
    %566 = vst [vmem:[#allocation3] sm:$0x2] %v560
    %567 = vst [vmem:[#allocation3 + $0x1] sm:$0x2] %v563
    %568 = vst [vmem:[#allocation3 + $0x1] sm:$0x4] %v560
    %569 = vst [vmem:[#allocation3 + $0x2] sm:$0x4] %v563
    %570 = vst [vmem:[#allocation3 + $0x2] sm:$0x8] %v560
    %571 = vst [vmem:[#allocation3 + $0x3] sm:$0x8] %v563
    %572 = vst [vmem:[#allocation3 + $0x3] sm:$0x10] %v560
    %573 = vst [vmem:[#allocation3 + $0x4] sm:$0x10] %v563
    %v574 = vmul.f32 %v451, %v554
    %v575 = vadd.f32 %v574, %v557
    %v576 = vmax.f32 %v575, 0.0
    %v577 = vmul.f32 %v457, %v554
    %v578 = vmul.f32 %v458, %v554
    %v579 = vadd.f32 %v577, %v557
    %v580 = vadd.f32 %v578, %v557
    %v581 = vmax.f32 %v579, 0.0
    %v582 = vmax.f32 %v580, 0.0
    %583 = vst [vmem:[#allocation3 + $0xa] sm:$0x1] 0.0
    %584 = vst [vmem:[#allocation3 + $0x13] sm:$0x1] 0.0
    %585 = vst [vmem:[#allocation3 + $0x4] sm:$0x80] %v560
    %586 = vst [vmem:[#allocation3 + $0x5] sm:$0x80] %v581
    %587 = vst [vmem:[#allocation3 + $0xd] sm:$0x1] %v576
    %588 = vst [vmem:[#allocation3 + $0xe] sm:$0x1] %v582
    %589 = vst [vmem:[#allocation3 + $0xe] sm:$0x2] %v576
    %590 = vst [vmem:[#allocation3 + $0xf] sm:$0x2] %v582
    %591 = vst [vmem:[#allocation3 + $0xf] sm:$0x4] %v576
    %592 = vst [vmem:[#allocation3 + $0x10] sm:$0x4] %v582
    %v593 = vld [vmem:[#allocation3] sm:$0xff]
    %v594 = vld [vmem:[#allocation3 + $0x8] sm:$0xff]
    %v595 = vld [vmem:[#allocation3 + $0x10] sm:$0xf]
    %v596 = vld [vmem:[#allocation12] sm:$0xff]
    %v597 = vld [vmem:[#allocation12 + $0x8] sm:$0xff]
    %v598 = vld [vmem:[#allocation12 + $0x10] sm:$0xff]
    %v599 = vld [vmem:[#allocation12 + $0x18] sm:$0xff]
    %v600 = vld [vmem:[#allocation12 + $0x20] sm:$0xff]
    %v601 = vld [vmem:[#allocation12 + $0x28] sm:$0xff]
    %v602 = vld [vmem:[#allocation12 + $0x30] sm:$0xff]
    %v603 = vld [vmem:[#allocation12 + $0x38] sm:$0xff]
    %v604 = vld [vmem:[#allocation12 + $0x40] sm:$0xff]
    %v605 = vld [vmem:[#allocation12 + $0x48] sm:$0xff]
    %v606 = vld [vmem:[#allocation12 + $0x50] sm:$0xff]
    %v607 = vld [vmem:[#allocation12 + $0x58] sm:$0xff]
    %v608 = vld [vmem:[#allocation12 + $0x60] sm:$0xff]
    %v609 = vld [vmem:[#allocation12 + $0x68] sm:$0xff]
    %v610 = vld [vmem:[#allocation12 + $0x70] sm:$0xff]
    %v611 = vld [vmem:[#allocation12 + $0x78] sm:$0xff]
    %v612 = vld [vmem:[#allocation12 + $0x80] sm:$0xff]
    %v613 = vld [vmem:[#allocation12 + $0x88] sm:$0xff]
    %v614 = vld [vmem:[#allocation12 + $0x90] sm:$0xff]
    %v615 = vld [vmem:[#allocation12 + $0x98] sm:$0xff]
    %v616 = vld [vmem:[#allocation12 + $0xa0] sm:$0xff]
    %v617 = vld [vmem:[#allocation12 + $0xa8] sm:$0xff]
    %v618 = vld [vmem:[#allocation12 + $0xb0] sm:$0xff]
    %v619 = vld [vmem:[#allocation12 + $0xb8] sm:$0xff]
    %v620 = vld [vmem:[#allocation12 + $0xc0] sm:$0xff]
    %v621 = vld [vmem:[#allocation12 + $0xc8] sm:$0xff]
    %v622 = vld [vmem:[#allocation12 + $0xd0] sm:$0xff]
    %v623 = vld [vmem:[#allocation12 + $0xd8] sm:$0xff]
    %v624 = vld [vmem:[#allocation12 + $0xe0] sm:$0xff]
    %v625 = vld [vmem:[#allocation12 + $0xe8] sm:$0xff]
    %v626 = vld [vmem:[#allocation12 + $0xf0] sm:$0xff]
    %v627 = vld [vmem:[#allocation12 + $0xf8] sm:$0xff]
    %v628 = vld [vmem:[#allocation12 + $0x100] sm:$0xff]
    %v629 = vld [vmem:[#allocation12 + $0x108] sm:$0xff]
    %v630 = vld [vmem:[#allocation12 + $0x110] sm:$0xff]
    %v631 = vld [vmem:[#allocation12 + $0x118] sm:$0xff]
    %v632 = vld [vmem:[#allocation12 + $0x120] sm:$0xff]
    %v633 = vld [vmem:[#allocation12 + $0x128] sm:$0xff]
    %v634 = vld [vmem:[#allocation12 + $0x130] sm:$0xff]
    %v635 = vld [vmem:[#allocation12 + $0x138] sm:$0xff]
    %v636 = vld [vmem:[#allocation12 + $0x140] sm:$0xff]
    %v637 = vld [vmem:[#allocation12 + $0x148] sm:$0xff]
    %v638 = vld [vmem:[#allocation12 + $0x150] sm:$0xff]
    %v639 = vld [vmem:[#allocation12 + $0x158] sm:$0xff]
    %v640 = vld [vmem:[#allocation12 + $0x160] sm:$0xff]
    %v641 = vld [vmem:[#allocation12 + $0x168] sm:$0xff]
    %v642 = vld [vmem:[#allocation12 + $0x170] sm:$0xff]
    %v643 = vld [vmem:[#allocation12 + $0x178] sm:$0xff]
    %v644 = vld [vmem:[#allocation12 + $0x180] sm:$0xff]
    %v645 = vld [vmem:[#allocation12 + $0x188] sm:$0xff]
    %v646 = vld [vmem:[#allocation12 + $0x190] sm:$0xff]
    %v647 = vld [vmem:[#allocation12 + $0x198] sm:$0xff]
    %v648 = vld [vmem:[#allocation12 + $0x1a0] sm:$0xff]
    %v649 = vld [vmem:[#allocation12 + $0x1a8] sm:$0xff]
    %v650 = vld [vmem:[#allocation12 + $0x1b0] sm:$0xff]
    %v651 = vld [vmem:[#allocation12 + $0x1b8] sm:$0xff]
    %v652 = vld [vmem:[#allocation12 + $0x1c0] sm:$0xff]
    %v653 = vld [vmem:[#allocation12 + $0x1c8] sm:$0xff]
    %v654 = vld [vmem:[#allocation12 + $0x1d0] sm:$0xff]
    %v655 = vld [vmem:[#allocation12 + $0x1d8] sm:$0xff]
    %v656 = vld [vmem:[#allocation12 + $0x1e0] sm:$0xff]
    %v657 = vld [vmem:[#allocation12 + $0x1e8] sm:$0xff]
    %v658 = vld [vmem:[#allocation12 + $0x1f0] sm:$0xff]
    %v659 = vld [vmem:[#allocation12 + $0x1f8] sm:$0xff]
    %660 = vmatpush.msra.mxu0 %v656
    %661 = vmatpush.msra.mxu0 %v652
    %662 = vmatpush.msra.mxu0 %v648
    %663 = vmatpush.msra.mxu0 %v644
    %664 = vmatpush.msra.mxu0 %v640
    %665 = vmatpush.msra.mxu0 %v636
    %666 = vmatpush.msra.mxu0 %v632
    %667 = vmatpush.msra.mxu0 %v628
    %668 = vmatpush.msra.mxu0 %v624
    %669 = vmatpush.msra.mxu0 %v620
    %670 = vmatpush.msra.mxu0 %v616
    %671 = vmatpush.msra.mxu0 %v612
    %672 = vmatpush.msra.mxu0 %v608
    %673 = vmatpush.msra.mxu0 %v604
    %674 = vmatpush.msra.mxu0 %v600
    %675 = vmatpush.msra.mxu0 %v596
    %676 = vmatmul.f32.gmra.mxu0 %v593
    %v677 = vpop.f32.mrf.mxu0
    %v678 = vadd.f32 0.0, %v677
    %679 = vmatmul.f32.gmra.mxu0 %v594
    %v680 = vpop.f32.mrf.mxu0
    %v681 = vadd.f32 0.0, %v680
    %682 = vmatmul.f32.gmra.mxu0 %v595
    %v683 = vpop.f32.mrf.mxu0
    %v684 = vadd.f32 0.0, %v683
    %685 = vdwg.mxu0
    %686 = vmatpush.msra.mxu0 %v657
    %687 = vmatpush.msra.mxu0 %v653
    %688 = vmatpush.msra.mxu0 %v649
    %689 = vmatpush.msra.mxu0 %v645
    %690 = vmatpush.msra.mxu0 %v641
    %691 = vmatpush.msra.mxu0 %v637
    %692 = vmatpush.msra.mxu0 %v633
    %693 = vmatpush.msra.mxu0 %v629
    %694 = vmatpush.msra.mxu0 %v625
    %695 = vmatpush.msra.mxu0 %v621
    %696 = vmatpush.msra.mxu0 %v617
    %697 = vmatpush.msra.mxu0 %v613
    %698 = vmatpush.msra.mxu0 %v609
    %699 = vmatpush.msra.mxu0 %v605
    %700 = vmatpush.msra.mxu0 %v601
    %701 = vmatpush.msra.mxu0 %v597
    %702 = vmatmul.f32.gmra.mxu0 %v593
    %v703 = vpop.f32.mrf.mxu0
    %v704 = vadd.f32 0.0, %v703
    %705 = vmatmul.f32.gmra.mxu0 %v594
    %v706 = vpop.f32.mrf.mxu0
    %v707 = vadd.f32 0.0, %v706
    %708 = vmatmul.f32.gmra.mxu0 %v595
    %v709 = vpop.f32.mrf.mxu0
    %v710 = vadd.f32 0.0, %v709
    %711 = vdwg.mxu0
    %712 = vmatpush.msra.mxu0 %v658
    %713 = vmatpush.msra.mxu0 %v654
    %714 = vmatpush.msra.mxu0 %v650
    %715 = vmatpush.msra.mxu0 %v646
    %716 = vmatpush.msra.mxu0 %v642
    %717 = vmatpush.msra.mxu0 %v638
    %718 = vmatpush.msra.mxu0 %v634
    %719 = vmatpush.msra.mxu0 %v630
    %720 = vmatpush.msra.mxu0 %v626
    %721 = vmatpush.msra.mxu0 %v622
    %722 = vmatpush.msra.mxu0 %v618
    %723 = vmatpush.msra.mxu0 %v614
    %724 = vmatpush.msra.mxu0 %v610
    %725 = vmatpush.msra.mxu0 %v606
    %726 = vmatpush.msra.mxu0 %v602
    %727 = vmatpush.msra.mxu0 %v598
    %728 = vmatmul.f32.gmra.mxu0 %v593
    %v729 = vpop.f32.mrf.mxu0
    %v730 = vadd.f32 0.0, %v729
    %731 = vmatmul.f32.gmra.mxu0 %v594
    %v732 = vpop.f32.mrf.mxu0
    %v733 = vadd.f32 0.0, %v732
    %734 = vmatmul.f32.gmra.mxu0 %v595
    %v735 = vpop.f32.mrf.mxu0
    %v736 = vadd.f32 0.0, %v735
    %737 = vdwg.mxu0
    %738 = vmatpush.msra.mxu0 %v659
    %739 = vmatpush.msra.mxu0 %v655
    %740 = vmatpush.msra.mxu0 %v651
    %741 = vmatpush.msra.mxu0 %v647
    %742 = vmatpush.msra.mxu0 %v643
    %743 = vmatpush.msra.mxu0 %v639
    %744 = vmatpush.msra.mxu0 %v635
    %745 = vmatpush.msra.mxu0 %v631
    %746 = vmatpush.msra.mxu0 %v627
    %747 = vmatpush.msra.mxu0 %v623
    %748 = vmatpush.msra.mxu0 %v619
    %749 = vmatpush.msra.mxu0 %v615
    %750 = vmatpush.msra.mxu0 %v611
    %751 = vmatpush.msra.mxu0 %v607
    %752 = vmatpush.msra.mxu0 %v603
    %753 = vmatpush.msra.mxu0 %v599
    %754 = vmatmul.f32.gmra.mxu0 %v593
    %v755 = vpop.f32.mrf.mxu0
    %v756 = vadd.f32 0.0, %v755
    %757 = vmatmul.f32.gmra.mxu0 %v594
    %v758 = vpop.f32.mrf.mxu0
    %v759 = vadd.f32 0.0, %v758
    %760 = vmatmul.f32.gmra.mxu0 %v595
    %v761 = vpop.f32.mrf.mxu0
    %v762 = vadd.f32 0.0, %v761
    %763 = vdwg.mxu0
    %v764 = vld [vmem:[%s8] sm:$0x1]
    %v766 = vrot.slane %v756, 7
    %v768 = vadd.f32 %v704, %v766
    %v769 = vadd.f32 %v707, %v766
    %v771 = vperm.slane %v764, 0
    %v773 = vadd.f32 %v768, %v771
    %v774 = vadd.f32 %v769, %v771
    %vm777 = vcmask 1046528
    %v778 = vrot.slane %v678, 1
    %v779 = vrot.slane %v681, 1
    %v780 = vsel %vm777, %v778, %v779
    %v783 = vadd.f32 %v730, %v780
    %v784 = vadd.f32 %v733, %v779
    %v785 = vadd.f32 %v783, %v771
    %v786 = vadd.f32 %v784, %v771
    %v787 = vtanh.pop %v773
    %v788 = vtanh.pop %v774
    %789 = vst [vmem:[#allocation13 - $0x1] sm:$0xfe] %v787
    %790 = vst [vmem:[#allocation13 + $0x7] sm:$0x1] %v788
    %v791 = vtanh.pop %v785
    %v792 = vtanh.pop %v786
    %s793 = scalar_lea.vmem [#allocation13], 16
    %794 = vst [vmem:[%s793 - $0x1] sm:$0xfe] %v791
    %795 = vst [vmem:[%s793 + $0x7] sm:$0x1] %v792
    %v798 = vrot.slane %v759, 7
    %v799 = vrot.slane %v762, 7
    %v800 = vsel %vm446, %v798, %v799
    %v803 = vadd.f32 %v707, %v798
    %v804 = vadd.f32 %v710, %v800
    %v805 = vadd.f32 %v803, %v771
    %v806 = vadd.f32 %v804, %v771
    %v808 = vrot.slane %v684, 1
    %v809 = vsel %vm777, %v779, %v808
    %v812 = vadd.f32 %v733, %v809
    %v813 = vadd.f32 %v736, %v808
    %v814 = vadd.f32 %v812, %v771
    %v815 = vadd.f32 %v813, %v771
    %v816 = vtanh.pop %v805
    %v817 = vtanh.pop %v806
    %818 = vst [vmem:[#allocation13 + $0x5] sm:$0xf8] %v816
    %819 = vst [vmem:[#allocation13 + $0xd] sm:$0x7] %v817
    %v820 = vtanh.pop %v814
    %v821 = vtanh.pop %v815
    %822 = vst [vmem:[%s793 + $0x5] sm:$0xf8] %v820
    %823 = vst [vmem:[%s793 + $0xd] sm:$0x7] %v821
    // Predicated region
    $region58: #{tpu_custom_call.1} parent=1 // pred_check
      _
    $region59: #{tpu_custom_call.1} parent=1 // pred_check_branch
      %825 = sbr.rel (0) target = $region61
    $region60: #{tpu_custom_call.1} parent=1 // pred_region
      %827 = vsyncadd [#allocation6], 0
      %s828 = sshll.u32 [#allocation13], 4
      %s829 = int_to_ptr.vmem [resolvable:$true] %s828
      %s830 = sshll.u32 %s9, 4
      %s831 = int_to_ptr.hbm [resolvable:$true] %s830
      %836 = dma.vmem_to_hbm [thread:$0]  %s829, 512, %s831, [#allocation6], 128, 128, 8
    $region61: #{tpu_custom_call.1} parent=1 // pred_fallthru
      _
    // Predicated region
    $region62: #{tpu_custom_call.1} parent=1 // pred_check
      _
    $region63: #{tpu_custom_call.1} parent=1 // pred_check_branch
      %838 = sbr.rel (0) target = $region65
    $region64: #{tpu_custom_call.1} parent=1 // pred_region
      %840 = dma.done [#allocation6], 512
    $region65: #{tpu_custom_call.1} parent=1 // pred_fallthru
      _
    %841 = vsyncpa [#allocation5], 1
    %842 = vsyncpa [#allocation8], 1
    %843 = vsyncpa [#allocation11], 1
    %844 = vsyncpa [#allocation6], 1

</llo_original>
